<compile_context>
chip_gen: v5e
topology: v5e:2x2
jax: 0.10.0
libtpu: 0.0.40
codegen_flags: <defaults>
</compile_context>

<pallas_src>
import jax
import jax.numpy as jnp
from jax.experimental import pallas as pl
from jax.experimental.pallas import tpu as pltpu

_LANE = 128      # TPU lane width (last dim)
_SUBLANE = 8     # TPU sublane width (second-to-last dim)


def _round_up(x, m):
    return ((x + m - 1) // m) * m


def _generator_kernel(x_ref,
                      w1, b1, w2, b2, w3, b3, w4, b4, w5, b5, w6, b6,
                      out_ref):
    """Fused forward: relu(fc1..fc5) -> fc6 (no final activation)."""
    h = x_ref[...]

    def linear(h, w_ref, b_ref):
        return jnp.dot(h, w_ref[...],
                       preferred_element_type=jnp.float32) + b_ref[...]

    h = jnp.maximum(linear(h, w1, b1), 0.0)
    h = jnp.maximum(linear(h, w2, b2), 0.0)
    h = jnp.maximum(linear(h, w3, b3), 0.0)
    h = jnp.maximum(linear(h, w4, b4), 0.0)
    h = jnp.maximum(linear(h, w5, b5), 0.0)
    out_ref[...] = linear(h, w6, b6).astype(out_ref.dtype)


def generator_forward(features, params, *, batch_tile=256):
    """features: (B, input_size) f32. params: list of (W, b), W:(in,out), b:(1,out)."""
    B, input_size = features.shape
    in_pad = _round_up(input_size, _LANE)    # lane-dense first-layer loads
    out_pad = _round_up(input_size, _LANE)   # lane-dense (unmasked) final stores

    # Batch tile: large by default to fill the MXU, shrink for tiny batches,
    # zero-pad B so arbitrary batch sizes work.
    tile = min(batch_tile, _round_up(B, _SUBLANE))
    b_pad = _round_up(B, tile)

    x = features
    if (b_pad, in_pad) != (B, input_size):
        x = jnp.zeros((b_pad, in_pad), features.dtype).at[:B, :input_size].set(features)

    # Zero-pad first-layer weight rows and last-layer weight/bias columns so
    # all matmul dims are multiples of 128; padding contributes exact zeros.
    padded = []
    n_layers = len(params)
    for li, (w, b) in enumerate(params):
        if li == 0 and w.shape[0] != in_pad:
            w = jnp.zeros((in_pad, w.shape[1]), w.dtype).at[:input_size, :].set(w)
        if li == n_layers - 1 and w.shape[1] != out_pad:
            w = jnp.zeros((w.shape[0], out_pad), w.dtype).at[:, :input_size].set(w)
            b = jnp.zeros((1, out_pad), b.dtype).at[:, :input_size].set(b)
        padded.append((w, b))

    grid = (b_pad // tile,)

    flat_params = []
    in_specs = [pl.BlockSpec((tile, in_pad), lambda i: (i, 0))]
    for w, b in padded:
        flat_params.extend([w, b])
        # Full-array blocks with a constant index map: resident in VMEM, no
        # per-step re-DMA. (Single-buffering them would free ~2 MB more VMEM
        # but is unnecessary at these sizes.)
        in_specs.append(pl.BlockSpec(w.shape, lambda i: (0, 0)))
        in_specs.append(pl.BlockSpec(b.shape, lambda i: (0, 0)))
    out_spec = pl.BlockSpec((tile, out_pad), lambda i: (i, 0))

    flops = 2 * b_pad * sum(w.shape[0] * w.shape[1] for w, _ in padded)
    bytes_accessed = 4 * (x.size + b_pad * out_pad
                          + sum(w.size + b.size for w, b in padded))

    out_padded = pl.pallas_call(
        _generator_kernel,
        out_shape=jax.ShapeDtypeStruct((b_pad, out_pad), jnp.float32),
        grid_spec=pltpu.PrefetchScalarGridSpec(
            num_scalar_prefetch=0,
            grid=grid,
            in_specs=in_specs,
            out_specs=out_spec,
        ),
        compiler_params=pltpu.CompilerParams(
            dimension_semantics=("parallel",)),
        cost_estimate=pl.CostEstimate(
            flops=flops, transcendentals=0, bytes_accessed=bytes_accessed),
    )(x, *flat_params)

    return out_padded[:B, :input_size]


def init_generator_params(key, input_size):
    """Weights: xavier_normal (as torch.nn.init.xavier_normal_), stored (in, out).
    Biases: uniform(-1/sqrt(in), 1/sqrt(in)) (PyTorch Linear default), kept (1, out)."""
    dims = [input_size, 512, 512, 256, 256, 128, input_size]
    params = []
    for li in range(6):
        fan_in, fan_out = dims[li], dims[li + 1]
        key, kw, kb = jax.random.split(key, 3)
        std = jnp.sqrt(2.0 / (fan_in + fan_out))
        w = std * jax.random.normal(kw, (fan_in, fan_out), dtype=jnp.float32)
        bound = 1.0 / jnp.sqrt(fan_in)
        b = jax.random.uniform(kb, (1, fan_out), dtype=jnp.float32,
                               minval=-bound, maxval=bound)
        params.append((w, b))
    return params


def generator_reference(features, params):
    h = features
    for i, (w, b) in enumerate(params):
        h = h @ w + b
        if i < 5:
            h = jnp.maximum(h, 0.0)
    return h


if __name__ == "__main__":
    key = jax.random.PRNGKey(0)
    input_size = 64

    kp, kf, kz, kf2 = jax.random.split(key, 4)
    params = init_generator_params(kp, input_size)

    fwd = jax.jit(generator_forward)   # pad -> pallas_call -> slice in one program

    # Small-batch check (tile auto-shrinks, features lane-padded 64 -> 128).
    batch = 8
    features = jax.random.normal(kf, (batch, input_size), dtype=jnp.float32)
    z = jax.random.normal(kz, (batch, input_size), dtype=jnp.float32)  # unused by forward
    out = jax.block_until_ready(fwd(features, params))
    ref = generator_reference(features, params)
    assert out.shape == (batch, input_size)
    assert jnp.allclose(out, ref, atol=1e-4, rtol=1e-4)

    # Larger batch: exercises batch_tile=256 with a multi-step "parallel" grid
    # (so both TensorCores are used on v7x).
    big_batch = 512
    features_big = jax.random.normal(kf2, (big_batch, input_size), dtype=jnp.float32)
    out_big = jax.block_until_ready(fwd(features_big, params))
    ref_big = generator_reference(features_big, params)
    assert out_big.shape == (big_batch, input_size)
    assert jnp.allclose(out_big, ref_big, atol=1e-4, rtol=1e-4)

    print("KERNEL_OK")
</pallas_src>

<mosaic_0001>
module attributes {stable_mosaic.version = 11 : i64} {
  func.func @_generator_kernel(%arg0: i32, %arg1: memref<8x128xf32, #tpu.memory_space<vmem>>, %arg2: memref<128x512xf32, #tpu.memory_space<vmem>>, %arg3: memref<1x512xf32, #tpu.memory_space<vmem>>, %arg4: memref<512x512xf32, #tpu.memory_space<vmem>>, %arg5: memref<1x512xf32, #tpu.memory_space<vmem>>, %arg6: memref<512x256xf32, #tpu.memory_space<vmem>>, %arg7: memref<1x256xf32, #tpu.memory_space<vmem>>, %arg8: memref<256x256xf32, #tpu.memory_space<vmem>>, %arg9: memref<1x256xf32, #tpu.memory_space<vmem>>, %arg10: memref<256x128xf32, #tpu.memory_space<vmem>>, %arg11: memref<1x128xf32, #tpu.memory_space<vmem>>, %arg12: memref<128x128xf32, #tpu.memory_space<vmem>>, %arg13: memref<1x128xf32, #tpu.memory_space<vmem>>, %arg14: memref<8x128xf32, #tpu.memory_space<vmem>>) attributes {dimension_semantics = [#tpu.dimension_semantics<parallel>], iteration_bounds = array<i64: 1>, scalar_prefetch = 0 : i64, scratch_operands = 0 : i64, tpu.core_type = #tpu.core_type<tc>, window_params = [{transform_indices = @transform_0, window_bounds = array<i64: 8, 128>}, {pipeline_mode = #tpu.pipeline_mode<synchronous>, transform_indices = @transform_1, window_bounds = array<i64: 128, 512>}, {pipeline_mode = #tpu.pipeline_mode<synchronous>, transform_indices = @transform_2, window_bounds = array<i64: 1, 512>}, {pipeline_mode = #tpu.pipeline_mode<synchronous>, transform_indices = @transform_3, window_bounds = array<i64: 512, 512>}, {pipeline_mode = #tpu.pipeline_mode<synchronous>, transform_indices = @transform_4, window_bounds = array<i64: 1, 512>}, {pipeline_mode = #tpu.pipeline_mode<synchronous>, transform_indices = @transform_5, window_bounds = array<i64: 512, 256>}, {pipeline_mode = #tpu.pipeline_mode<synchronous>, transform_indices = @transform_6, window_bounds = array<i64: 1, 256>}, {pipeline_mode = #tpu.pipeline_mode<synchronous>, transform_indices = @transform_7, window_bounds = array<i64: 256, 256>}, {pipeline_mode = #tpu.pipeline_mode<synchronous>, transform_indices = @transform_8, window_bounds = array<i64: 1, 256>}, {pipeline_mode = #tpu.pipeline_mode<synchronous>, transform_indices = @transform_9, window_bounds = array<i64: 256, 128>}, {pipeline_mode = #tpu.pipeline_mode<synchronous>, transform_indices = @transform_10, window_bounds = array<i64: 1, 128>}, {pipeline_mode = #tpu.pipeline_mode<synchronous>, transform_indices = @transform_11, window_bounds = array<i64: 128, 128>}, {pipeline_mode = #tpu.pipeline_mode<synchronous>, transform_indices = @transform_12, window_bounds = array<i64: 1, 128>}, {transform_indices = @transform_13, window_bounds = array<i64: 8, 128>}]} {
    %c0 = arith.constant 0 : index
    %c0_0 = arith.constant 0 : index
    %0 = vector.load %arg1[%c0, %c0_0] : memref<8x128xf32, #tpu.memory_space<vmem>>, vector<8x128xf32>
    %c0_1 = arith.constant 0 : index
    %c0_2 = arith.constant 0 : index
    %1 = vector.load %arg2[%c0_1, %c0_2] : memref<128x512xf32, #tpu.memory_space<vmem>>, vector<128x512xf32>
    %cst = arith.constant dense<0.000000e+00> : vector<8x512xf32>
    %2 = tpu.matmul %0, %1, %cst {dimension_numbers = #tpu.dot_dimension_numbers<[1], [0], [0], [1], [0, 0, 1, 1], [], []>} : vector<8x128xf32>, vector<128x512xf32>, vector<8x512xf32> -> vector<8x512xf32>
    %c0_3 = arith.constant 0 : index
    %c0_4 = arith.constant 0 : index
    %3 = vector.load %arg3[%c0_3, %c0_4] : memref<1x512xf32, #tpu.memory_space<vmem>>, vector<1x512xf32>
    %4 = vector.broadcast %3 : vector<1x512xf32> to vector<8x512xf32>
    %5 = arith.addf %2, %4 : vector<8x512xf32>
    %cst_5 = arith.constant 0.000000e+00 : f32
    %6 = vector.broadcast %cst_5 : f32 to vector<8x512xf32>
    %7 = arith.maximumf %5, %6 : vector<8x512xf32>
    %c0_6 = arith.constant 0 : index
    %c0_7 = arith.constant 0 : index
    %8 = vector.load %arg4[%c0_6, %c0_7] : memref<512x512xf32, #tpu.memory_space<vmem>>, vector<512x512xf32>
    %cst_8 = arith.constant dense<0.000000e+00> : vector<8x512xf32>
    %9 = tpu.matmul %7, %8, %cst_8 {dimension_numbers = #tpu.dot_dimension_numbers<[1], [0], [0], [1], [0, 0, 1, 1], [], []>} : vector<8x512xf32>, vector<512x512xf32>, vector<8x512xf32> -> vector<8x512xf32>
    %c0_9 = arith.constant 0 : index
    %c0_10 = arith.constant 0 : index
    %10 = vector.load %arg5[%c0_9, %c0_10] : memref<1x512xf32, #tpu.memory_space<vmem>>, vector<1x512xf32>
    %11 = vector.broadcast %10 : vector<1x512xf32> to vector<8x512xf32>
    %12 = arith.addf %9, %11 : vector<8x512xf32>
    %cst_11 = arith.constant 0.000000e+00 : f32
    %13 = vector.broadcast %cst_11 : f32 to vector<8x512xf32>
    %14 = arith.maximumf %12, %13 : vector<8x512xf32>
    %c0_12 = arith.constant 0 : index
    %c0_13 = arith.constant 0 : index
    %15 = vector.load %arg6[%c0_12, %c0_13] : memref<512x256xf32, #tpu.memory_space<vmem>>, vector<512x256xf32>
    %cst_14 = arith.constant dense<0.000000e+00> : vector<8x256xf32>
    %16 = tpu.matmul %14, %15, %cst_14 {dimension_numbers = #tpu.dot_dimension_numbers<[1], [0], [0], [1], [0, 0, 1, 1], [], []>} : vector<8x512xf32>, vector<512x256xf32>, vector<8x256xf32> -> vector<8x256xf32>
    %c0_15 = arith.constant 0 : index
    %c0_16 = arith.constant 0 : index
    %17 = vector.load %arg7[%c0_15, %c0_16] : memref<1x256xf32, #tpu.memory_space<vmem>>, vector<1x256xf32>
    %18 = vector.broadcast %17 : vector<1x256xf32> to vector<8x256xf32>
    %19 = arith.addf %16, %18 : vector<8x256xf32>
    %cst_17 = arith.constant 0.000000e+00 : f32
    %20 = vector.broadcast %cst_17 : f32 to vector<8x256xf32>
    %21 = arith.maximumf %19, %20 : vector<8x256xf32>
    %c0_18 = arith.constant 0 : index
    %c0_19 = arith.constant 0 : index
    %22 = vector.load %arg8[%c0_18, %c0_19] : memref<256x256xf32, #tpu.memory_space<vmem>>, vector<256x256xf32>
    %cst_20 = arith.constant dense<0.000000e+00> : vector<8x256xf32>
    %23 = tpu.matmul %21, %22, %cst_20 {dimension_numbers = #tpu.dot_dimension_numbers<[1], [0], [0], [1], [0, 0, 1, 1], [], []>} : vector<8x256xf32>, vector<256x256xf32>, vector<8x256xf32> -> vector<8x256xf32>
    %c0_21 = arith.constant 0 : index
    %c0_22 = arith.constant 0 : index
    %24 = vector.load %arg9[%c0_21, %c0_22] : memref<1x256xf32, #tpu.memory_space<vmem>>, vector<1x256xf32>
    %25 = vector.broadcast %24 : vector<1x256xf32> to vector<8x256xf32>
    %26 = arith.addf %23, %25 : vector<8x256xf32>
    %cst_23 = arith.constant 0.000000e+00 : f32
    %27 = vector.broadcast %cst_23 : f32 to vector<8x256xf32>
    %28 = arith.maximumf %26, %27 : vector<8x256xf32>
    %c0_24 = arith.constant 0 : index
    %c0_25 = arith.constant 0 : index
    %29 = vector.load %arg10[%c0_24, %c0_25] : memref<256x128xf32, #tpu.memory_space<vmem>>, vector<256x128xf32>
    %cst_26 = arith.constant dense<0.000000e+00> : vector<8x128xf32>
    %30 = tpu.matmul %28, %29, %cst_26 {dimension_numbers = #tpu.dot_dimension_numbers<[1], [0], [0], [1], [0, 0, 1, 1], [], []>} : vector<8x256xf32>, vector<256x128xf32>, vector<8x128xf32> -> vector<8x128xf32>
    %c0_27 = arith.constant 0 : index
    %c0_28 = arith.constant 0 : index
    %31 = vector.load %arg11[%c0_27, %c0_28] : memref<1x128xf32, #tpu.memory_space<vmem>>, vector<1x128xf32>
    %32 = vector.broadcast %31 : vector<1x128xf32> to vector<8x128xf32>
    %33 = arith.addf %30, %32 : vector<8x128xf32>
    %cst_29 = arith.constant 0.000000e+00 : f32
    %34 = vector.broadcast %cst_29 : f32 to vector<8x128xf32>
    %35 = arith.maximumf %33, %34 : vector<8x128xf32>
    %c0_30 = arith.constant 0 : index
    %c0_31 = arith.constant 0 : index
    %36 = vector.load %arg12[%c0_30, %c0_31] : memref<128x128xf32, #tpu.memory_space<vmem>>, vector<128x128xf32>
    %cst_32 = arith.constant dense<0.000000e+00> : vector<8x128xf32>
    %37 = tpu.matmul %35, %36, %cst_32 {dimension_numbers = #tpu.dot_dimension_numbers<[1], [0], [0], [1], [0, 0, 1, 1], [], []>} : vector<8x128xf32>, vector<128x128xf32>, vector<8x128xf32> -> vector<8x128xf32>
    %c0_33 = arith.constant 0 : index
    %c0_34 = arith.constant 0 : index
    %38 = vector.load %arg13[%c0_33, %c0_34] : memref<1x128xf32, #tpu.memory_space<vmem>>, vector<1x128xf32>
    %39 = vector.broadcast %38 : vector<1x128xf32> to vector<8x128xf32>
    %40 = arith.addf %37, %39 : vector<8x128xf32>
    %c0_35 = arith.constant 0 : index
    %c0_36 = arith.constant 0 : index
    %41 = vector.load %arg14[%c0_35, %c0_36] : memref<8x128xf32, #tpu.memory_space<vmem>>, vector<8x128xf32>
    tpu.vector_store %arg14[%c0_35, %c0_36], %40 {strides = array<i32>} : memref<8x128xf32, #tpu.memory_space<vmem>>, vector<8x128xf32>,
    return
  }
  func.func @transform_0(%arg0: i32) -> (i32, i32) {
    %c0_i32 = arith.constant 0 : i32
    %c0_i32_0 = arith.constant 0 : i32
    return %arg0, %c0_i32 : i32, i32
  }
  func.func @transform_1(%arg0: i32) -> (i32, i32) {
    %c0_i32 = arith.constant 0 : i32
    %c0_i32_0 = arith.constant 0 : i32
    %c0_i32_1 = arith.constant 0 : i32
    return %c0_i32, %c0_i32_0 : i32, i32
  }
  func.func @transform_2(%arg0: i32) -> (i32, i32) {
    %c0_i32 = arith.constant 0 : i32
    %c0_i32_0 = arith.constant 0 : i32
    %c0_i32_1 = arith.constant 0 : i32
    return %c0_i32, %c0_i32_0 : i32, i32
  }
  func.func @transform_3(%arg0: i32) -> (i32, i32) {
    %c0_i32 = arith.constant 0 : i32
    %c0_i32_0 = arith.constant 0 : i32
    %c0_i32_1 = arith.constant 0 : i32
    return %c0_i32, %c0_i32_0 : i32, i32
  }
  func.func @transform_4(%arg0: i32) -> (i32, i32) {
    %c0_i32 = arith.constant 0 : i32
    %c0_i32_0 = arith.constant 0 : i32
    %c0_i32_1 = arith.constant 0 : i32
    return %c0_i32, %c0_i32_0 : i32, i32
  }
  func.func @transform_5(%arg0: i32) -> (i32, i32) {
    %c0_i32 = arith.constant 0 : i32
    %c0_i32_0 = arith.constant 0 : i32
    %c0_i32_1 = arith.constant 0 : i32
    return %c0_i32, %c0_i32_0 : i32, i32
  }
  func.func @transform_6(%arg0: i32) -> (i32, i32) {
    %c0_i32 = arith.constant 0 : i32
    %c0_i32_0 = arith.constant 0 : i32
    %c0_i32_1 = arith.constant 0 : i32
    return %c0_i32, %c0_i32_0 : i32, i32
  }
  func.func @transform_7(%arg0: i32) -> (i32, i32) {
    %c0_i32 = arith.constant 0 : i32
    %c0_i32_0 = arith.constant 0 : i32
    %c0_i32_1 = arith.constant 0 : i32
    return %c0_i32, %c0_i32_0 : i32, i32
  }
  func.func @transform_8(%arg0: i32) -> (i32, i32) {
    %c0_i32 = arith.constant 0 : i32
    %c0_i32_0 = arith.constant 0 : i32
    %c0_i32_1 = arith.constant 0 : i32
    return %c0_i32, %c0_i32_0 : i32, i32
  }
  func.func @transform_9(%arg0: i32) -> (i32, i32) {
    %c0_i32 = arith.constant 0 : i32
    %c0_i32_0 = arith.constant 0 : i32
    %c0_i32_1 = arith.constant 0 : i32
    return %c0_i32, %c0_i32_0 : i32, i32
  }
  func.func @transform_10(%arg0: i32) -> (i32, i32) {
    %c0_i32 = arith.constant 0 : i32
    %c0_i32_0 = arith.constant 0 : i32
    %c0_i32_1 = arith.constant 0 : i32
    return %c0_i32, %c0_i32_0 : i32, i32
  }
  func.func @transform_11(%arg0: i32) -> (i32, i32) {
    %c0_i32 = arith.constant 0 : i32
    %c0_i32_0 = arith.constant 0 : i32
    %c0_i32_1 = arith.constant 0 : i32
    return %c0_i32, %c0_i32_0 : i32, i32
  }
  func.func @transform_12(%arg0: i32) -> (i32, i32) {
    %c0_i32 = arith.constant 0 : i32
    %c0_i32_0 = arith.constant 0 : i32
    %c0_i32_1 = arith.constant 0 : i32
    return %c0_i32, %c0_i32_0 : i32, i32
  }
  func.func @transform_13(%arg0: i32) -> (i32, i32) {
    %c0_i32 = arith.constant 0 : i32
    %c0_i32_0 = arith.constant 0 : i32
    return %arg0, %c0_i32 : i32, i32
  }
}

</mosaic_0001>

<llo_original>
// kernel: generator_forward.1
$region0: #{generator_forward.1}
  #allocation0 [shape = 'u32[]', space=smem, size = 0x4, offset = 0x4, fixed_abs, tag = 'smem constant byte address 0x4 - core index']
  #allocation1 [shape = 'u32[72,128]{1,0:T(1,128)}', space=vmem, size = 0x9000, scoped, tag = 'internal scratch']
  %s0 = inlined_call_operand.vmem [shape: f32[8,128], index: 0, kind: input, shape index: {}]
  %s1 = inlined_call_operand.vmem [shape: f32[128,512], index: 1, kind: input, shape index: {}]
  %s2 = inlined_call_operand.vmem [shape: f32[1,512], index: 2, kind: input, shape index: {}]
  %s3 = inlined_call_operand.hbm [shape: f32[512,512], index: 3, kind: input, shape index: {}]
  %s4 = inlined_call_operand.vmem [shape: f32[1,512], index: 4, kind: input, shape index: {}]
  %s5 = inlined_call_operand.vmem [shape: f32[512,256], index: 5, kind: input, shape index: {}]
  %s6 = inlined_call_operand.vmem [shape: f32[1,256], index: 6, kind: input, shape index: {}]
  %s7 = inlined_call_operand.hbm [shape: f32[256,256], index: 7, kind: input, shape index: {}]
  %s8 = inlined_call_operand.vmem [shape: f32[1,256], index: 8, kind: input, shape index: {}]
  %s9 = inlined_call_operand.vmem [shape: f32[256,128], index: 9, kind: input, shape index: {}]
  %s10 = inlined_call_operand.vmem [shape: f32[1,128], index: 10, kind: input, shape index: {}]
  %s11 = inlined_call_operand.vmem [shape: f32[128,128], index: 11, kind: input, shape index: {}]
  %s12 = inlined_call_operand.vmem [shape: f32[1,128], index: 12, kind: input, shape index: {}]
  %s13 = inlined_call_operand.hbm [shape: f32[8,128], index: 13, kind: output, shape index: {}]
  %s14 = sld [smem:[#allocation0]]
  $region70: #{generator_forward.1} parent=0
    _
  %s16 = ssub.s32 1, %s14
  %s17 = scalar_select 0, %s16, %s14
  $region1: #{generator_forward.1} parent=0
    #allocation2 [shape = 'u8[1048576]{0}', space=vmem, size = 0x100000, scoped, tag = 'input window, operand 3, single buffered']
    #allocation3 [shape = 's32[1]{0}', space=sflag, size = 0x4, scoped, tag = 'scoped memory for generator_forward.1']
    #allocation4 [shape = 's32[1]{0}', space=sflag, size = 0x4, scoped, tag = 'scoped memory for generator_forward.1']
    #allocation5 [shape = 'u8[262144]{0}', space=vmem, size = 0x40000, scoped, tag = 'input window, operand 7, single buffered']
    #allocation6 [shape = 's32[1]{0}', space=sflag, size = 0x4, scoped, tag = 'scoped memory for generator_forward.1']
    #allocation7 [shape = 'u8[4096]{0}', space=vmem, size = 0x1000, scoped, tag = 'output window, operand 0, single buffered']
    %18 = vsyncpa [#allocation3], 0
    %19 = vsyncpa [#allocation6], 0
    %20 = vsyncpa [#allocation4], 0
    // Predicated region
    $region2: #{generator_forward.1} parent=1 // pred_check
      _
    $region3: #{generator_forward.1} parent=1 // pred_check_branch
      %22 = sbr.rel (0) target = $region5
    $region4: #{generator_forward.1} parent=1 // pred_region
      _
    $region5: #{generator_forward.1} parent=1 // pred_fallthru
      _
    // Predicated region
    $region6: #{generator_forward.1} parent=1 // pred_check
      _
    $region7: #{generator_forward.1} parent=1 // pred_check_branch
      %24 = sbr.rel (0) target = $region9
    $region8: #{generator_forward.1} parent=1 // pred_region
      _
    $region9: #{generator_forward.1} parent=1 // pred_fallthru
      _
    // Predicated region
    $region10: #{generator_forward.1} parent=1 // pred_check
      _
    $region11: #{generator_forward.1} parent=1 // pred_check_branch
      %26 = sbr.rel (0) target = $region13
    $region12: #{generator_forward.1} parent=1 // pred_region
      _
    $region13: #{generator_forward.1} parent=1 // pred_fallthru
      _
    // Predicated region
    $region14: #{generator_forward.1} parent=1 // pred_check
      _
    $region15: #{generator_forward.1} parent=1 // pred_check_branch
      %28 = sbr.rel (0) target = $region17
    $region16: #{generator_forward.1} parent=1 // pred_region
      %30 = vsyncadd [#allocation3], 0
      %s31 = sshll.u32 %s3, 4
      %s32 = int_to_ptr.hbm [resolvable:$true] %s31
      %s33 = sshll.u32 [#allocation2], 4
      %s34 = int_to_ptr.vmem [resolvable:$true] %s33
      %39 = dma.hbm_to_vmem [thread:$0]  %s32, 32768, %s34, [#allocation3], 512, 512, 32
    $region17: #{generator_forward.1} parent=1 // pred_fallthru
      _
    // Predicated region
    $region18: #{generator_forward.1} parent=1 // pred_check
      _
    $region19: #{generator_forward.1} parent=1 // pred_check_branch
      %41 = sbr.rel (0) target = $region21
    $region20: #{generator_forward.1} parent=1 // pred_region
      _
    $region21: #{generator_forward.1} parent=1 // pred_fallthru
      _
    // Predicated region
    $region22: #{generator_forward.1} parent=1 // pred_check
      _
    $region23: #{generator_forward.1} parent=1 // pred_check_branch
      %43 = sbr.rel (0) target = $region25
    $region24: #{generator_forward.1} parent=1 // pred_region
      _
    $region25: #{generator_forward.1} parent=1 // pred_fallthru
      _
    // Predicated region
    $region26: #{generator_forward.1} parent=1 // pred_check
      _
    $region27: #{generator_forward.1} parent=1 // pred_check_branch
      %45 = sbr.rel (0) target = $region29
    $region28: #{generator_forward.1} parent=1 // pred_region
      _
    $region29: #{generator_forward.1} parent=1 // pred_fallthru
      _
    // Predicated region
    $region30: #{generator_forward.1} parent=1 // pred_check
      _
    $region31: #{generator_forward.1} parent=1 // pred_check_branch
      %47 = sbr.rel (0) target = $region33
    $region32: #{generator_forward.1} parent=1 // pred_region
      %49 = vsyncadd [#allocation6], 0
      %s50 = sshll.u32 %s7, 4
      %s51 = int_to_ptr.hbm [resolvable:$true] %s50
      %s52 = sshll.u32 [#allocation5], 4
      %s53 = int_to_ptr.vmem [resolvable:$true] %s52
      %58 = dma.hbm_to_vmem [thread:$0]  %s51, 8192, %s53, [#allocation6], 256, 256, 16
    $region33: #{generator_forward.1} parent=1 // pred_fallthru
      _
    // Predicated region
    $region34: #{generator_forward.1} parent=1 // pred_check
      _
    $region35: #{generator_forward.1} parent=1 // pred_check_branch
      %60 = sbr.rel (0) target = $region37
    $region36: #{generator_forward.1} parent=1 // pred_region
      _
    $region37: #{generator_forward.1} parent=1 // pred_fallthru
      _
    // Predicated region
    $region38: #{generator_forward.1} parent=1 // pred_check
      _
    $region39: #{generator_forward.1} parent=1 // pred_check_branch
      %62 = sbr.rel (0) target = $region41
    $region40: #{generator_forward.1} parent=1 // pred_region
      _
    $region41: #{generator_forward.1} parent=1 // pred_fallthru
      _
    // Predicated region
    $region42: #{generator_forward.1} parent=1 // pred_check
      _
    $region43: #{generator_forward.1} parent=1 // pred_check_branch
      %64 = sbr.rel (0) target = $region45
    $region44: #{generator_forward.1} parent=1 // pred_region
      _
    $region45: #{generator_forward.1} parent=1 // pred_fallthru
      _
    // Predicated region
    $region46: #{generator_forward.1} parent=1 // pred_check
      _
    $region47: #{generator_forward.1} parent=1 // pred_check_branch
      %66 = sbr.rel (0) target = $region49
    $region48: #{generator_forward.1} parent=1 // pred_region
      _
    $region49: #{generator_forward.1} parent=1 // pred_fallthru
      _
    // Predicated region
    $region50: #{generator_forward.1} parent=1 // pred_check
      _
    $region51: #{generator_forward.1} parent=1 // pred_check_branch
      %68 = sbr.rel (0) target = $region53
    $region52: #{generator_forward.1} parent=1 // pred_region
      _
    $region53: #{generator_forward.1} parent=1 // pred_fallthru
      _
    // Predicated region
    $region54: #{generator_forward.1} parent=1 // pred_check
      _
    $region55: #{generator_forward.1} parent=1 // pred_check_branch
      %70 = sbr.rel (0) target = $region57
    $region56: #{generator_forward.1} parent=1 // pred_region
      %72 = dma.done [#allocation3], 32768
    $region57: #{generator_forward.1} parent=1 // pred_fallthru
      _
    // Predicated region
    $region58: #{generator_forward.1} parent=1 // pred_check
      _
    $region59: #{generator_forward.1} parent=1 // pred_check_branch
      %74 = sbr.rel (0) target = $region61
    $region60: #{generator_forward.1} parent=1 // pred_region
      %76 = dma.done [#allocation6], 8192
    $region61: #{generator_forward.1} parent=1 // pred_fallthru
      _
    %v77 = vld [vmem:[%s0] sm:$0xff]
    %v78 = vld [vmem:[%s1] sm:$0xff]
    %v79 = vld [vmem:[%s1 + $0x8] sm:$0xff]
    %v80 = vld [vmem:[%s1 + $0x10] sm:$0xff]
    %v81 = vld [vmem:[%s1 + $0x18] sm:$0xff]
    %v82 = vld [vmem:[%s1 + $0x20] sm:$0xff]
    %v83 = vld [vmem:[%s1 + $0x28] sm:$0xff]
    %v84 = vld [vmem:[%s1 + $0x30] sm:$0xff]
    %v85 = vld [vmem:[%s1 + $0x38] sm:$0xff]
    %v86 = vld [vmem:[%s1 + $0x40] sm:$0xff]
    %v87 = vld [vmem:[%s1 + $0x48] sm:$0xff]
    %v88 = vld [vmem:[%s1 + $0x50] sm:$0xff]
    %v89 = vld [vmem:[%s1 + $0x58] sm:$0xff]
    %v90 = vld [vmem:[%s1 + $0x60] sm:$0xff]
    %v91 = vld [vmem:[%s1 + $0x68] sm:$0xff]
    %v92 = vld [vmem:[%s1 + $0x70] sm:$0xff]
    %v93 = vld [vmem:[%s1 + $0x78] sm:$0xff]
    %v94 = vld [vmem:[%s1 + $0x80] sm:$0xff]
    %v95 = vld [vmem:[%s1 + $0x88] sm:$0xff]
    %v96 = vld [vmem:[%s1 + $0x90] sm:$0xff]
    %v97 = vld [vmem:[%s1 + $0x98] sm:$0xff]
    %v98 = vld [vmem:[%s1 + $0xa0] sm:$0xff]
    %v99 = vld [vmem:[%s1 + $0xa8] sm:$0xff]
    %v100 = vld [vmem:[%s1 + $0xb0] sm:$0xff]
    %v101 = vld [vmem:[%s1 + $0xb8] sm:$0xff]
    %v102 = vld [vmem:[%s1 + $0xc0] sm:$0xff]
    %v103 = vld [vmem:[%s1 + $0xc8] sm:$0xff]
    %v104 = vld [vmem:[%s1 + $0xd0] sm:$0xff]
    %v105 = vld [vmem:[%s1 + $0xd8] sm:$0xff]
    %v106 = vld [vmem:[%s1 + $0xe0] sm:$0xff]
    %v107 = vld [vmem:[%s1 + $0xe8] sm:$0xff]
    %v108 = vld [vmem:[%s1 + $0xf0] sm:$0xff]
    %v109 = vld [vmem:[%s1 + $0xf8] sm:$0xff]
    %v110 = vld [vmem:[%s1 + $0x100] sm:$0xff]
    %v111 = vld [vmem:[%s1 + $0x108] sm:$0xff]
    %v112 = vld [vmem:[%s1 + $0x110] sm:$0xff]
    %v113 = vld [vmem:[%s1 + $0x118] sm:$0xff]
    %v114 = vld [vmem:[%s1 + $0x120] sm:$0xff]
    %v115 = vld [vmem:[%s1 + $0x128] sm:$0xff]
    %v116 = vld [vmem:[%s1 + $0x130] sm:$0xff]
    %v117 = vld [vmem:[%s1 + $0x138] sm:$0xff]
    %v118 = vld [vmem:[%s1 + $0x140] sm:$0xff]
    %v119 = vld [vmem:[%s1 + $0x148] sm:$0xff]
    %v120 = vld [vmem:[%s1 + $0x150] sm:$0xff]
    %v121 = vld [vmem:[%s1 + $0x158] sm:$0xff]
    %v122 = vld [vmem:[%s1 + $0x160] sm:$0xff]
    %v123 = vld [vmem:[%s1 + $0x168] sm:$0xff]
    %v124 = vld [vmem:[%s1 + $0x170] sm:$0xff]
    %v125 = vld [vmem:[%s1 + $0x178] sm:$0xff]
    %v126 = vld [vmem:[%s1 + $0x180] sm:$0xff]
    %v127 = vld [vmem:[%s1 + $0x188] sm:$0xff]
    %v128 = vld [vmem:[%s1 + $0x190] sm:$0xff]
    %v129 = vld [vmem:[%s1 + $0x198] sm:$0xff]
    %v130 = vld [vmem:[%s1 + $0x1a0] sm:$0xff]
    %v131 = vld [vmem:[%s1 + $0x1a8] sm:$0xff]
    %v132 = vld [vmem:[%s1 + $0x1b0] sm:$0xff]
    %v133 = vld [vmem:[%s1 + $0x1b8] sm:$0xff]
    %v134 = vld [vmem:[%s1 + $0x1c0] sm:$0xff]
    %v135 = vld [vmem:[%s1 + $0x1c8] sm:$0xff]
    %v136 = vld [vmem:[%s1 + $0x1d0] sm:$0xff]
    %v137 = vld [vmem:[%s1 + $0x1d8] sm:$0xff]
    %v138 = vld [vmem:[%s1 + $0x1e0] sm:$0xff]
    %v139 = vld [vmem:[%s1 + $0x1e8] sm:$0xff]
    %v140 = vld [vmem:[%s1 + $0x1f0] sm:$0xff]
    %v141 = vld [vmem:[%s1 + $0x1f8] sm:$0xff]
    %v142 = vld [vmem:[%s2] sm:$0xf]
    %v144 = vperm.slane %v142, 0
    %v145 = vperm.slane %v142, 1
    %v146 = vperm.slane %v142, 2
    %v147 = vperm.slane %v142, 3
    %152 = vmatpush.msra.mxu0 %v138
    %153 = vmatpush.msra.mxu0 %v134
    %154 = vmatpush.msra.mxu0 %v130
    %155 = vmatpush.msra.mxu0 %v126
    %156 = vmatpush.msra.mxu0 %v122
    %157 = vmatpush.msra.mxu0 %v118
    %158 = vmatpush.msra.mxu0 %v114
    %159 = vmatpush.msra.mxu0 %v110
    %160 = vmatpush.msra.mxu0 %v106
    %161 = vmatpush.msra.mxu0 %v102
    %162 = vmatpush.msra.mxu0 %v98
    %163 = vmatpush.msra.mxu0 %v94
    %164 = vmatpush.msra.mxu0 %v90
    %165 = vmatpush.msra.mxu0 %v86
    %166 = vmatpush.msra.mxu0 %v82
    %167 = vmatpush.msra.mxu0 %v78
    %168 = vmatmul.f32.gmra.mxu0 %v77
    %v169 = vpop.f32.mrf.mxu0
    %v170 = vadd.f32 %v144, %v169
    %171 = vdwg.mxu0
    %172 = vmatpush.msra.mxu0 %v139
    %173 = vmatpush.msra.mxu0 %v135
    %174 = vmatpush.msra.mxu0 %v131
    %175 = vmatpush.msra.mxu0 %v127
    %176 = vmatpush.msra.mxu0 %v123
    %177 = vmatpush.msra.mxu0 %v119
    %178 = vmatpush.msra.mxu0 %v115
    %179 = vmatpush.msra.mxu0 %v111
    %180 = vmatpush.msra.mxu0 %v107
    %181 = vmatpush.msra.mxu0 %v103
    %182 = vmatpush.msra.mxu0 %v99
    %183 = vmatpush.msra.mxu0 %v95
    %184 = vmatpush.msra.mxu0 %v91
    %185 = vmatpush.msra.mxu0 %v87
    %186 = vmatpush.msra.mxu0 %v83
    %187 = vmatpush.msra.mxu0 %v79
    %188 = vmatmul.f32.gmra.mxu0 %v77
    %v189 = vpop.f32.mrf.mxu0
    %v190 = vadd.f32 %v145, %v189
    %191 = vdwg.mxu0
    %192 = vmatpush.msra.mxu0 %v140
    %193 = vmatpush.msra.mxu0 %v136
    %194 = vmatpush.msra.mxu0 %v132
    %195 = vmatpush.msra.mxu0 %v128
    %196 = vmatpush.msra.mxu0 %v124
    %197 = vmatpush.msra.mxu0 %v120
    %198 = vmatpush.msra.mxu0 %v116
    %199 = vmatpush.msra.mxu0 %v112
    %200 = vmatpush.msra.mxu0 %v108
    %201 = vmatpush.msra.mxu0 %v104
    %202 = vmatpush.msra.mxu0 %v100
    %203 = vmatpush.msra.mxu0 %v96
    %204 = vmatpush.msra.mxu0 %v92
    %205 = vmatpush.msra.mxu0 %v88
    %206 = vmatpush.msra.mxu0 %v84
    %207 = vmatpush.msra.mxu0 %v80
    %208 = vmatmul.f32.gmra.mxu0 %v77
    %v209 = vpop.f32.mrf.mxu0
    %v210 = vadd.f32 %v146, %v209
    %211 = vdwg.mxu0
    %212 = vmatpush.msra.mxu0 %v141
    %213 = vmatpush.msra.mxu0 %v137
    %214 = vmatpush.msra.mxu0 %v133
    %215 = vmatpush.msra.mxu0 %v129
    %216 = vmatpush.msra.mxu0 %v125
    %217 = vmatpush.msra.mxu0 %v121
    %218 = vmatpush.msra.mxu0 %v117
    %219 = vmatpush.msra.mxu0 %v113
    %220 = vmatpush.msra.mxu0 %v109
    %221 = vmatpush.msra.mxu0 %v105
    %222 = vmatpush.msra.mxu0 %v101
    %223 = vmatpush.msra.mxu0 %v97
    %224 = vmatpush.msra.mxu0 %v93
    %225 = vmatpush.msra.mxu0 %v89
    %226 = vmatpush.msra.mxu0 %v85
    %227 = vmatpush.msra.mxu0 %v81
    %228 = vmatmul.f32.gmra.mxu0 %v77
    %v229 = vpop.f32.mrf.mxu0
    %v230 = vadd.f32 %v147, %v229
    %231 = vdwg.mxu0
    %v232 = vmax.f32 %v170, 0.0
    %v233 = vmax.f32 %v190, 0.0
    %v234 = vmax.f32 %v210, 0.0
    %v235 = vmax.f32 %v230, 0.0
    %v236 = vld [vmem:[#allocation2] sm:$0xff]
    %v237 = vld [vmem:[#allocation2 + $0x8] sm:$0xff]
    %v238 = vld [vmem:[#allocation2 + $0x10] sm:$0xff]
    %v239 = vld [vmem:[#allocation2 + $0x18] sm:$0xff]
    %v240 = vld [vmem:[#allocation2 + $0x20] sm:$0xff]
    %v241 = vld [vmem:[#allocation2 + $0x28] sm:$0xff]
    %v242 = vld [vmem:[#allocation2 + $0x30] sm:$0xff]
    %v243 = vld [vmem:[#allocation2 + $0x38] sm:$0xff]
    %v244 = vld [vmem:[#allocation2 + $0x40] sm:$0xff]
    %v245 = vld [vmem:[#allocation2 + $0x48] sm:$0xff]
    %v246 = vld [vmem:[#allocation2 + $0x50] sm:$0xff]
    %v247 = vld [vmem:[#allocation2 + $0x58] sm:$0xff]
    %v248 = vld [vmem:[#allocation2 + $0x60] sm:$0xff]
    %v249 = vld [vmem:[#allocation2 + $0x68] sm:$0xff]
    %v250 = vld [vmem:[#allocation2 + $0x70] sm:$0xff]
    %v251 = vld [vmem:[#allocation2 + $0x78] sm:$0xff]
    %v252 = vld [vmem:[#allocation2 + $0x80] sm:$0xff]
    %v253 = vld [vmem:[#allocation2 + $0x88] sm:$0xff]
    %v254 = vld [vmem:[#allocation2 + $0x90] sm:$0xff]
    %v255 = vld [vmem:[#allocation2 + $0x98] sm:$0xff]
    %v256 = vld [vmem:[#allocation2 + $0xa0] sm:$0xff]
    %v257 = vld [vmem:[#allocation2 + $0xa8] sm:$0xff]
    %v258 = vld [vmem:[#allocation2 + $0xb0] sm:$0xff]
    %v259 = vld [vmem:[#allocation2 + $0xb8] sm:$0xff]
    %v260 = vld [vmem:[#allocation2 + $0xc0] sm:$0xff]
    %v261 = vld [vmem:[#allocation2 + $0xc8] sm:$0xff]
    %v262 = vld [vmem:[#allocation2 + $0xd0] sm:$0xff]
    %v263 = vld [vmem:[#allocation2 + $0xd8] sm:$0xff]
    %v264 = vld [vmem:[#allocation2 + $0xe0] sm:$0xff]
    %v265 = vld [vmem:[#allocation2 + $0xe8] sm:$0xff]
    %v266 = vld [vmem:[#allocation2 + $0xf0] sm:$0xff]
    %v267 = vld [vmem:[#allocation2 + $0xf8] sm:$0xff]
    %v268 = vld [vmem:[#allocation2 + $0x100] sm:$0xff]
    %v269 = vld [vmem:[#allocation2 + $0x108] sm:$0xff]
    %v270 = vld [vmem:[#allocation2 + $0x110] sm:$0xff]
    %v271 = vld [vmem:[#allocation2 + $0x118] sm:$0xff]
    %v272 = vld [vmem:[#allocation2 + $0x120] sm:$0xff]
    %v273 = vld [vmem:[#allocation2 + $0x128] sm:$0xff]
    %v274 = vld [vmem:[#allocation2 + $0x130] sm:$0xff]
    %v275 = vld [vmem:[#allocation2 + $0x138] sm:$0xff]
    %v276 = vld [vmem:[#allocation2 + $0x140] sm:$0xff]
    %v277 = vld [vmem:[#allocation2 + $0x148] sm:$0xff]
    %v278 = vld [vmem:[#allocation2 + $0x150] sm:$0xff]
    %v279 = vld [vmem:[#allocation2 + $0x158] sm:$0xff]
    %v280 = vld [vmem:[#allocation2 + $0x160] sm:$0xff]
    %v281 = vld [vmem:[#allocation2 + $0x168] sm:$0xff]
    %v282 = vld [vmem:[#allocation2 + $0x170] sm:$0xff]
    %v283 = vld [vmem:[#allocation2 + $0x178] sm:$0xff]
    %v284 = vld [vmem:[#allocation2 + $0x180] sm:$0xff]
    %v285 = vld [vmem:[#allocation2 + $0x188] sm:$0xff]
    %v286 = vld [vmem:[#allocation2 + $0x190] sm:$0xff]
    %v287 = vld [vmem:[#allocation2 + $0x198] sm:$0xff]
    %v288 = vld [vmem:[#allocation2 + $0x1a0] sm:$0xff]
    %v289 = vld [vmem:[#allocation2 + $0x1a8] sm:$0xff]
    %v290 = vld [vmem:[#allocation2 + $0x1b0] sm:$0xff]
    %v291 = vld [vmem:[#allocation2 + $0x1b8] sm:$0xff]
    %v292 = vld [vmem:[#allocation2 + $0x1c0] sm:$0xff]
    %v293 = vld [vmem:[#allocation2 + $0x1c8] sm:$0xff]
    %v294 = vld [vmem:[#allocation2 + $0x1d0] sm:$0xff]
    %v295 = vld [vmem:[#allocation2 + $0x1d8] sm:$0xff]
    %v296 = vld [vmem:[#allocation2 + $0x1e0] sm:$0xff]
    %v297 = vld [vmem:[#allocation2 + $0x1e8] sm:$0xff]
    %v298 = vld [vmem:[#allocation2 + $0x1f0] sm:$0xff]
    %v299 = vld [vmem:[#allocation2 + $0x1f8] sm:$0xff]
    %v300 = vld [vmem:[#allocation2 + $0x200] sm:$0xff]
    %v301 = vld [vmem:[#allocation2 + $0x208] sm:$0xff]
    %v302 = vld [vmem:[#allocation2 + $0x210] sm:$0xff]
    %v303 = vld [vmem:[#allocation2 + $0x218] sm:$0xff]
    %v304 = vld [vmem:[#allocation2 + $0x220] sm:$0xff]
    %v305 = vld [vmem:[#allocation2 + $0x228] sm:$0xff]
    %v306 = vld [vmem:[#allocation2 + $0x230] sm:$0xff]
    %v307 = vld [vmem:[#allocation2 + $0x238] sm:$0xff]
    %v308 = vld [vmem:[#allocation2 + $0x240] sm:$0xff]
    %v309 = vld [vmem:[#allocation2 + $0x248] sm:$0xff]
    %v310 = vld [vmem:[#allocation2 + $0x250] sm:$0xff]
    %v311 = vld [vmem:[#allocation2 + $0x258] sm:$0xff]
    %v312 = vld [vmem:[#allocation2 + $0x260] sm:$0xff]
    %v313 = vld [vmem:[#allocation2 + $0x268] sm:$0xff]
    %v314 = vld [vmem:[#allocation2 + $0x270] sm:$0xff]
    %v315 = vld [vmem:[#allocation2 + $0x278] sm:$0xff]
    %v316 = vld [vmem:[#allocation2 + $0x280] sm:$0xff]
    %v317 = vld [vmem:[#allocation2 + $0x288] sm:$0xff]
    %v318 = vld [vmem:[#allocation2 + $0x290] sm:$0xff]
    %v319 = vld [vmem:[#allocation2 + $0x298] sm:$0xff]
    %v320 = vld [vmem:[#allocation2 + $0x2a0] sm:$0xff]
    %v321 = vld [vmem:[#allocation2 + $0x2a8] sm:$0xff]
    %v322 = vld [vmem:[#allocation2 + $0x2b0] sm:$0xff]
    %v323 = vld [vmem:[#allocation2 + $0x2b8] sm:$0xff]
    %v324 = vld [vmem:[#allocation2 + $0x2c0] sm:$0xff]
    %v325 = vld [vmem:[#allocation2 + $0x2c8] sm:$0xff]
    %v326 = vld [vmem:[#allocation2 + $0x2d0] sm:$0xff]
    %v327 = vld [vmem:[#allocation2 + $0x2d8] sm:$0xff]
    %v328 = vld [vmem:[#allocation2 + $0x2e0] sm:$0xff]
    %v329 = vld [vmem:[#allocation2 + $0x2e8] sm:$0xff]
    %v330 = vld [vmem:[#allocation2 + $0x2f0] sm:$0xff]
    %v331 = vld [vmem:[#allocation2 + $0x2f8] sm:$0xff]
    %v332 = vld [vmem:[#allocation2 + $0x300] sm:$0xff]
    %v333 = vld [vmem:[#allocation2 + $0x308] sm:$0xff]
    %v334 = vld [vmem:[#allocation2 + $0x310] sm:$0xff]
    %v335 = vld [vmem:[#allocation2 + $0x318] sm:$0xff]
    %v336 = vld [vmem:[#allocation2 + $0x320] sm:$0xff]
    %v337 = vld [vmem:[#allocation2 + $0x328] sm:$0xff]
    %v338 = vld [vmem:[#allocation2 + $0x330] sm:$0xff]
    %v339 = vld [vmem:[#allocation2 + $0x338] sm:$0xff]
    %v340 = vld [vmem:[#allocation2 + $0x340] sm:$0xff]
    %v341 = vld [vmem:[#allocation2 + $0x348] sm:$0xff]
    %v342 = vld [vmem:[#allocation2 + $0x350] sm:$0xff]
    %v343 = vld [vmem:[#allocation2 + $0x358] sm:$0xff]
    %v344 = vld [vmem:[#allocation2 + $0x360] sm:$0xff]
    %v345 = vld [vmem:[#allocation2 + $0x368] sm:$0xff]
    %v346 = vld [vmem:[#allocation2 + $0x370] sm:$0xff]
    %v347 = vld [vmem:[#allocation2 + $0x378] sm:$0xff]
    %v348 = vld [vmem:[#allocation2 + $0x380] sm:$0xff]
    %v349 = vld [vmem:[#allocation2 + $0x388] sm:$0xff]
    %v350 = vld [vmem:[#allocation2 + $0x390] sm:$0xff]
    %v351 = vld [vmem:[#allocation2 + $0x398] sm:$0xff]
    %v352 = vld [vmem:[#allocation2 + $0x3a0] sm:$0xff]
    %v353 = vld [vmem:[#allocation2 + $0x3a8] sm:$0xff]
    %v354 = vld [vmem:[#allocation2 + $0x3b0] sm:$0xff]
    %v355 = vld [vmem:[#allocation2 + $0x3b8] sm:$0xff]
    %v356 = vld [vmem:[#allocation2 + $0x3c0] sm:$0xff]
    %v357 = vld [vmem:[#allocation2 + $0x3c8] sm:$0xff]
    %v358 = vld [vmem:[#allocation2 + $0x3d0] sm:$0xff]
    %v359 = vld [vmem:[#allocation2 + $0x3d8] sm:$0xff]
    %v360 = vld [vmem:[#allocation2 + $0x3e0] sm:$0xff]
    %v361 = vld [vmem:[#allocation2 + $0x3e8] sm:$0xff]
    %v362 = vld [vmem:[#allocation2 + $0x3f0] sm:$0xff]
    %v363 = vld [vmem:[#allocation2 + $0x3f8] sm:$0xff]
    %v364 = vld [vmem:[#allocation2 + $0x400] sm:$0xff]
    %v365 = vld [vmem:[#allocation2 + $0x408] sm:$0xff]
    %v366 = vld [vmem:[#allocation2 + $0x410] sm:$0xff]
    %v367 = vld [vmem:[#allocation2 + $0x418] sm:$0xff]
    %v368 = vld [vmem:[#allocation2 + $0x420] sm:$0xff]
    %v369 = vld [vmem:[#allocation2 + $0x428] sm:$0xff]
    %v370 = vld [vmem:[#allocation2 + $0x430] sm:$0xff]
    %v371 = vld [vmem:[#allocation2 + $0x438] sm:$0xff]
    %v372 = vld [vmem:[#allocation2 + $0x440] sm:$0xff]
    %v373 = vld [vmem:[#allocation2 + $0x448] sm:$0xff]
    %v374 = vld [vmem:[#allocation2 + $0x450] sm:$0xff]
    %v375 = vld [vmem:[#allocation2 + $0x458] sm:$0xff]
    %v376 = vld [vmem:[#allocation2 + $0x460] sm:$0xff]
    %v377 = vld [vmem:[#allocation2 + $0x468] sm:$0xff]
    %v378 = vld [vmem:[#allocation2 + $0x470] sm:$0xff]
    %v379 = vld [vmem:[#allocation2 + $0x478] sm:$0xff]
    %v380 = vld [vmem:[#allocation2 + $0x480] sm:$0xff]
    %v381 = vld [vmem:[#allocation2 + $0x488] sm:$0xff]
    %v382 = vld [vmem:[#allocation2 + $0x490] sm:$0xff]
    %v383 = vld [vmem:[#allocation2 + $0x498] sm:$0xff]
    %v384 = vld [vmem:[#allocation2 + $0x4a0] sm:$0xff]
    %v385 = vld [vmem:[#allocation2 + $0x4a8] sm:$0xff]
    %v386 = vld [vmem:[#allocation2 + $0x4b0] sm:$0xff]
    %v387 = vld [vmem:[#allocation2 + $0x4b8] sm:$0xff]
    %v388 = vld [vmem:[#allocation2 + $0x4c0] sm:$0xff]
    %v389 = vld [vmem:[#allocation2 + $0x4c8] sm:$0xff]
    %v390 = vld [vmem:[#allocation2 + $0x4d0] sm:$0xff]
    %v391 = vld [vmem:[#allocation2 + $0x4d8] sm:$0xff]
    %v392 = vld [vmem:[#allocation2 + $0x4e0] sm:$0xff]
    %v393 = vld [vmem:[#allocation2 + $0x4e8] sm:$0xff]
    %v394 = vld [vmem:[#allocation2 + $0x4f0] sm:$0xff]
    %v395 = vld [vmem:[#allocation2 + $0x4f8] sm:$0xff]
    %v396 = vld [vmem:[#allocation2 + $0x500] sm:$0xff]
    %v397 = vld [vmem:[#allocation2 + $0x508] sm:$0xff]
    %v398 = vld [vmem:[#allocation2 + $0x510] sm:$0xff]
    %v399 = vld [vmem:[#allocation2 + $0x518] sm:$0xff]
    %v400 = vld [vmem:[#allocation2 + $0x520] sm:$0xff]
    %v401 = vld [vmem:[#allocation2 + $0x528] sm:$0xff]
    %v402 = vld [vmem:[#allocation2 + $0x530] sm:$0xff]
    %v403 = vld [vmem:[#allocation2 + $0x538] sm:$0xff]
    %v404 = vld [vmem:[#allocation2 + $0x540] sm:$0xff]
    %v405 = vld [vmem:[#allocation2 + $0x548] sm:$0xff]
    %v406 = vld [vmem:[#allocation2 + $0x550] sm:$0xff]
    %v407 = vld [vmem:[#allocation2 + $0x558] sm:$0xff]
    %v408 = vld [vmem:[#allocation2 + $0x560] sm:$0xff]
    %v409 = vld [vmem:[#allocation2 + $0x568] sm:$0xff]
    %v410 = vld [vmem:[#allocation2 + $0x570] sm:$0xff]
    %v411 = vld [vmem:[#allocation2 + $0x578] sm:$0xff]
    %v412 = vld [vmem:[#allocation2 + $0x580] sm:$0xff]
    %v413 = vld [vmem:[#allocation2 + $0x588] sm:$0xff]
    %v414 = vld [vmem:[#allocation2 + $0x590] sm:$0xff]
    %v415 = vld [vmem:[#allocation2 + $0x598] sm:$0xff]
    %v416 = vld [vmem:[#allocation2 + $0x5a0] sm:$0xff]
    %v417 = vld [vmem:[#allocation2 + $0x5a8] sm:$0xff]
    %v418 = vld [vmem:[#allocation2 + $0x5b0] sm:$0xff]
    %v419 = vld [vmem:[#allocation2 + $0x5b8] sm:$0xff]
    %v420 = vld [vmem:[#allocation2 + $0x5c0] sm:$0xff]
    %v421 = vld [vmem:[#allocation2 + $0x5c8] sm:$0xff]
    %v422 = vld [vmem:[#allocation2 + $0x5d0] sm:$0xff]
    %v423 = vld [vmem:[#allocation2 + $0x5d8] sm:$0xff]
    %v424 = vld [vmem:[#allocation2 + $0x5e0] sm:$0xff]
    %v425 = vld [vmem:[#allocation2 + $0x5e8] sm:$0xff]
    %v426 = vld [vmem:[#allocation2 + $0x5f0] sm:$0xff]
    %v427 = vld [vmem:[#allocation2 + $0x5f8] sm:$0xff]
    %v428 = vld [vmem:[#allocation2 + $0x600] sm:$0xff]
    %v429 = vld [vmem:[#allocation2 + $0x608] sm:$0xff]
    %v430 = vld [vmem:[#allocation2 + $0x610] sm:$0xff]
    %v431 = vld [vmem:[#allocation2 + $0x618] sm:$0xff]
    %v432 = vld [vmem:[#allocation2 + $0x620] sm:$0xff]
    %v433 = vld [vmem:[#allocation2 + $0x628] sm:$0xff]
    %v434 = vld [vmem:[#allocation2 + $0x630] sm:$0xff]
    %v435 = vld [vmem:[#allocation2 + $0x638] sm:$0xff]
    %v436 = vld [vmem:[#allocation2 + $0x640] sm:$0xff]
    %v437 = vld [vmem:[#allocation2 + $0x648] sm:$0xff]
    %v438 = vld [vmem:[#allocation2 + $0x650] sm:$0xff]
    %v439 = vld [vmem:[#allocation2 + $0x658] sm:$0xff]
    %v440 = vld [vmem:[#allocation2 + $0x660] sm:$0xff]
    %v441 = vld [vmem:[#allocation2 + $0x668] sm:$0xff]
    %v442 = vld [vmem:[#allocation2 + $0x670] sm:$0xff]
    %v443 = vld [vmem:[#allocation2 + $0x678] sm:$0xff]
    %v444 = vld [vmem:[#allocation2 + $0x680] sm:$0xff]
    %v445 = vld [vmem:[#allocation2 + $0x688] sm:$0xff]
    %v446 = vld [vmem:[#allocation2 + $0x690] sm:$0xff]
    %v447 = vld [vmem:[#allocation2 + $0x698] sm:$0xff]
    %v448 = vld [vmem:[#allocation2 + $0x6a0] sm:$0xff]
    %v449 = vld [vmem:[#allocation2 + $0x6a8] sm:$0xff]
    %v450 = vld [vmem:[#allocation2 + $0x6b0] sm:$0xff]
    %v451 = vld [vmem:[#allocation2 + $0x6b8] sm:$0xff]
    %v452 = vld [vmem:[#allocation2 + $0x6c0] sm:$0xff]
    %v453 = vld [vmem:[#allocation2 + $0x6c8] sm:$0xff]
    %v454 = vld [vmem:[#allocation2 + $0x6d0] sm:$0xff]
    %v455 = vld [vmem:[#allocation2 + $0x6d8] sm:$0xff]
    %v456 = vld [vmem:[#allocation2 + $0x6e0] sm:$0xff]
    %v457 = vld [vmem:[#allocation2 + $0x6e8] sm:$0xff]
    %v458 = vld [vmem:[#allocation2 + $0x6f0] sm:$0xff]
    %v459 = vld [vmem:[#allocation2 + $0x6f8] sm:$0xff]
    %v460 = vld [vmem:[#allocation2 + $0x700] sm:$0xff]
    %v461 = vld [vmem:[#allocation2 + $0x708] sm:$0xff]
    %v462 = vld [vmem:[#allocation2 + $0x710] sm:$0xff]
    %v463 = vld [vmem:[#allocation2 + $0x718] sm:$0xff]
    %v464 = vld [vmem:[#allocation2 + $0x720] sm:$0xff]
    %v465 = vld [vmem:[#allocation2 + $0x728] sm:$0xff]
    %v466 = vld [vmem:[#allocation2 + $0x730] sm:$0xff]
    %v467 = vld [vmem:[#allocation2 + $0x738] sm:$0xff]
    %v468 = vld [vmem:[#allocation2 + $0x740] sm:$0xff]
    %v469 = vld [vmem:[#allocation2 + $0x748] sm:$0xff]
    %v470 = vld [vmem:[#allocation2 + $0x750] sm:$0xff]
    %v471 = vld [vmem:[#allocation2 + $0x758] sm:$0xff]
    %v472 = vld [vmem:[#allocation2 + $0x760] sm:$0xff]
    %v473 = vld [vmem:[#allocation2 + $0x768] sm:$0xff]
    %v474 = vld [vmem:[#allocation2 + $0x770] sm:$0xff]
    %v475 = vld [vmem:[#allocation2 + $0x778] sm:$0xff]
    %v476 = vld [vmem:[#allocation2 + $0x780] sm:$0xff]
    %v477 = vld [vmem:[#allocation2 + $0x788] sm:$0xff]
    %v478 = vld [vmem:[#allocation2 + $0x790] sm:$0xff]
    %v479 = vld [vmem:[#allocation2 + $0x798] sm:$0xff]
    %v480 = vld [vmem:[#allocation2 + $0x7a0] sm:$0xff]
    %v481 = vld [vmem:[#allocation2 + $0x7a8] sm:$0xff]
    %v482 = vld [vmem:[#allocation2 + $0x7b0] sm:$0xff]
    %v483 = vld [vmem:[#allocation2 + $0x7b8] sm:$0xff]
    %v484 = vld [vmem:[#allocation2 + $0x7c0] sm:$0xff]
    %v485 = vld [vmem:[#allocation2 + $0x7c8] sm:$0xff]
    %v486 = vld [vmem:[#allocation2 + $0x7d0] sm:$0xff]
    %v487 = vld [vmem:[#allocation2 + $0x7d8] sm:$0xff]
    %v488 = vld [vmem:[#allocation2 + $0x7e0] sm:$0xff]
    %v489 = vld [vmem:[#allocation2 + $0x7e8] sm:$0xff]
    %v490 = vld [vmem:[#allocation2 + $0x7f0] sm:$0xff]
    %v491 = vld [vmem:[#allocation2 + $0x7f8] sm:$0xff]
    %v492 = vld [vmem:[%s4] sm:$0xf]
    %v494 = vperm.slane %v492, 0
    %v495 = vperm.slane %v492, 1
    %v496 = vperm.slane %v492, 2
    %v497 = vperm.slane %v492, 3
    %502 = vmatpush.msra.mxu0 %v296
    %503 = vmatpush.msra.mxu0 %v292
    %504 = vmatpush.msra.mxu0 %v288
    %505 = vmatpush.msra.mxu0 %v284
    %506 = vmatpush.msra.mxu0 %v280
    %507 = vmatpush.msra.mxu0 %v276
    %508 = vmatpush.msra.mxu0 %v272
    %509 = vmatpush.msra.mxu0 %v268
    %510 = vmatpush.msra.mxu0 %v264
    %511 = vmatpush.msra.mxu0 %v260
    %512 = vmatpush.msra.mxu0 %v256
    %513 = vmatpush.msra.mxu0 %v252
    %514 = vmatpush.msra.mxu0 %v248
    %515 = vmatpush.msra.mxu0 %v244
    %516 = vmatpush.msra.mxu0 %v240
    %517 = vmatpush.msra.mxu0 %v236
    %518 = vmatmul.f32.gmra.mxu0 %v232
    %v519 = vpop.f32.mrf.mxu0
    %v520 = vadd.f32 %v494, %v519
    %521 = vdwg.mxu0
    %522 = vmatpush.msra.mxu0 %v360
    %523 = vmatpush.msra.mxu0 %v356
    %524 = vmatpush.msra.mxu0 %v352
    %525 = vmatpush.msra.mxu0 %v348
    %526 = vmatpush.msra.mxu0 %v344
    %527 = vmatpush.msra.mxu0 %v340
    %528 = vmatpush.msra.mxu0 %v336
    %529 = vmatpush.msra.mxu0 %v332
    %530 = vmatpush.msra.mxu0 %v328
    %531 = vmatpush.msra.mxu0 %v324
    %532 = vmatpush.msra.mxu0 %v320
    %533 = vmatpush.msra.mxu0 %v316
    %534 = vmatpush.msra.mxu0 %v312
    %535 = vmatpush.msra.mxu0 %v308
    %536 = vmatpush.msra.mxu0 %v304
    %537 = vmatpush.msra.mxu0 %v300
    %538 = vmatmul.f32.gmra.mxu0 %v233
    %v539 = vpop.f32.mrf.mxu0
    %v540 = vadd.f32 %v520, %v539
    %541 = vdwg.mxu0
    %542 = vmatpush.msra.mxu0 %v424
    %543 = vmatpush.msra.mxu0 %v420
    %544 = vmatpush.msra.mxu0 %v416
    %545 = vmatpush.msra.mxu0 %v412
    %546 = vmatpush.msra.mxu0 %v408
    %547 = vmatpush.msra.mxu0 %v404
    %548 = vmatpush.msra.mxu0 %v400
    %549 = vmatpush.msra.mxu0 %v396
    %550 = vmatpush.msra.mxu0 %v392
    %551 = vmatpush.msra.mxu0 %v388
    %552 = vmatpush.msra.mxu0 %v384
    %553 = vmatpush.msra.mxu0 %v380
    %554 = vmatpush.msra.mxu0 %v376
    %555 = vmatpush.msra.mxu0 %v372
    %556 = vmatpush.msra.mxu0 %v368
    %557 = vmatpush.msra.mxu0 %v364
    %558 = vmatmul.f32.gmra.mxu0 %v234
    %v559 = vpop.f32.mrf.mxu0
    %v560 = vadd.f32 %v540, %v559
    %561 = vdwg.mxu0
    %562 = vmatpush.msra.mxu0 %v488
    %563 = vmatpush.msra.mxu0 %v484
    %564 = vmatpush.msra.mxu0 %v480
    %565 = vmatpush.msra.mxu0 %v476
    %566 = vmatpush.msra.mxu0 %v472
    %567 = vmatpush.msra.mxu0 %v468
    %568 = vmatpush.msra.mxu0 %v464
    %569 = vmatpush.msra.mxu0 %v460
    %570 = vmatpush.msra.mxu0 %v456
    %571 = vmatpush.msra.mxu0 %v452
    %572 = vmatpush.msra.mxu0 %v448
    %573 = vmatpush.msra.mxu0 %v444
    %574 = vmatpush.msra.mxu0 %v440
    %575 = vmatpush.msra.mxu0 %v436
    %576 = vmatpush.msra.mxu0 %v432
    %577 = vmatpush.msra.mxu0 %v428
    %578 = vmatmul.f32.gmra.mxu0 %v235
    %v579 = vpop.f32.mrf.mxu0
    %v580 = vadd.f32 %v560, %v579
    %581 = vdwg.mxu0
    %582 = vmatpush.msra.mxu0 %v297
    %583 = vmatpush.msra.mxu0 %v293
    %584 = vmatpush.msra.mxu0 %v289
    %585 = vmatpush.msra.mxu0 %v285
    %586 = vmatpush.msra.mxu0 %v281
    %587 = vmatpush.msra.mxu0 %v277
    %588 = vmatpush.msra.mxu0 %v273
    %589 = vmatpush.msra.mxu0 %v269
    %590 = vmatpush.msra.mxu0 %v265
    %591 = vmatpush.msra.mxu0 %v261
    %592 = vmatpush.msra.mxu0 %v257
    %593 = vmatpush.msra.mxu0 %v253
    %594 = vmatpush.msra.mxu0 %v249
    %595 = vmatpush.msra.mxu0 %v245
    %596 = vmatpush.msra.mxu0 %v241
    %597 = vmatpush.msra.mxu0 %v237
    %598 = vmatmul.f32.gmra.mxu0 %v232
    %v599 = vpop.f32.mrf.mxu0
    %v600 = vadd.f32 %v495, %v599
    %601 = vdwg.mxu0
    %602 = vmatpush.msra.mxu0 %v361
    %603 = vmatpush.msra.mxu0 %v357
    %604 = vmatpush.msra.mxu0 %v353
    %605 = vmatpush.msra.mxu0 %v349
    %606 = vmatpush.msra.mxu0 %v345
    %607 = vmatpush.msra.mxu0 %v341
    %608 = vmatpush.msra.mxu0 %v337
    %609 = vmatpush.msra.mxu0 %v333
    %610 = vmatpush.msra.mxu0 %v329
    %611 = vmatpush.msra.mxu0 %v325
    %612 = vmatpush.msra.mxu0 %v321
    %613 = vmatpush.msra.mxu0 %v317
    %614 = vmatpush.msra.mxu0 %v313
    %615 = vmatpush.msra.mxu0 %v309
    %616 = vmatpush.msra.mxu0 %v305
    %617 = vmatpush.msra.mxu0 %v301
    %618 = vmatmul.f32.gmra.mxu0 %v233
    %v619 = vpop.f32.mrf.mxu0
    %v620 = vadd.f32 %v600, %v619
    %621 = vdwg.mxu0
    %622 = vmatpush.msra.mxu0 %v425
    %623 = vmatpush.msra.mxu0 %v421
    %624 = vmatpush.msra.mxu0 %v417
    %625 = vmatpush.msra.mxu0 %v413
    %626 = vmatpush.msra.mxu0 %v409
    %627 = vmatpush.msra.mxu0 %v405
    %628 = vmatpush.msra.mxu0 %v401
    %629 = vmatpush.msra.mxu0 %v397
    %630 = vmatpush.msra.mxu0 %v393
    %631 = vmatpush.msra.mxu0 %v389
    %632 = vmatpush.msra.mxu0 %v385
    %633 = vmatpush.msra.mxu0 %v381
    %634 = vmatpush.msra.mxu0 %v377
    %635 = vmatpush.msra.mxu0 %v373
    %636 = vmatpush.msra.mxu0 %v369
    %637 = vmatpush.msra.mxu0 %v365
    %638 = vmatmul.f32.gmra.mxu0 %v234
    %v639 = vpop.f32.mrf.mxu0
    %v640 = vadd.f32 %v620, %v639
    %641 = vdwg.mxu0
    %642 = vmatpush.msra.mxu0 %v489
    %643 = vmatpush.msra.mxu0 %v485
    %644 = vmatpush.msra.mxu0 %v481
    %645 = vmatpush.msra.mxu0 %v477
    %646 = vmatpush.msra.mxu0 %v473
    %647 = vmatpush.msra.mxu0 %v469
    %648 = vmatpush.msra.mxu0 %v465
    %649 = vmatpush.msra.mxu0 %v461
    %650 = vmatpush.msra.mxu0 %v457
    %651 = vmatpush.msra.mxu0 %v453
    %652 = vmatpush.msra.mxu0 %v449
    %653 = vmatpush.msra.mxu0 %v445
    %654 = vmatpush.msra.mxu0 %v441
    %655 = vmatpush.msra.mxu0 %v437
    %656 = vmatpush.msra.mxu0 %v433
    %657 = vmatpush.msra.mxu0 %v429
    %658 = vmatmul.f32.gmra.mxu0 %v235
    %v659 = vpop.f32.mrf.mxu0
    %v660 = vadd.f32 %v640, %v659
    %661 = vdwg.mxu0
    %662 = vmatpush.msra.mxu0 %v298
    %663 = vmatpush.msra.mxu0 %v294
    %664 = vmatpush.msra.mxu0 %v290
    %665 = vmatpush.msra.mxu0 %v286
    %666 = vmatpush.msra.mxu0 %v282
    %667 = vmatpush.msra.mxu0 %v278
    %668 = vmatpush.msra.mxu0 %v274
    %669 = vmatpush.msra.mxu0 %v270
    %670 = vmatpush.msra.mxu0 %v266
    %671 = vmatpush.msra.mxu0 %v262
    %672 = vmatpush.msra.mxu0 %v258
    %673 = vmatpush.msra.mxu0 %v254
    %674 = vmatpush.msra.mxu0 %v250
    %675 = vmatpush.msra.mxu0 %v246
    %676 = vmatpush.msra.mxu0 %v242
    %677 = vmatpush.msra.mxu0 %v238
    %678 = vmatmul.f32.gmra.mxu0 %v232
    %v679 = vpop.f32.mrf.mxu0
    %v680 = vadd.f32 %v496, %v679
    %681 = vdwg.mxu0
    %682 = vmatpush.msra.mxu0 %v362
    %683 = vmatpush.msra.mxu0 %v358
    %684 = vmatpush.msra.mxu0 %v354
    %685 = vmatpush.msra.mxu0 %v350
    %686 = vmatpush.msra.mxu0 %v346
    %687 = vmatpush.msra.mxu0 %v342
    %688 = vmatpush.msra.mxu0 %v338
    %689 = vmatpush.msra.mxu0 %v334
    %690 = vmatpush.msra.mxu0 %v330
    %691 = vmatpush.msra.mxu0 %v326
    %692 = vmatpush.msra.mxu0 %v322
    %693 = vmatpush.msra.mxu0 %v318
    %694 = vmatpush.msra.mxu0 %v314
    %695 = vmatpush.msra.mxu0 %v310
    %696 = vmatpush.msra.mxu0 %v306
    %697 = vmatpush.msra.mxu0 %v302
    %698 = vmatmul.f32.gmra.mxu0 %v233
    %v699 = vpop.f32.mrf.mxu0
    %v700 = vadd.f32 %v680, %v699
    %701 = vdwg.mxu0
    %702 = vmatpush.msra.mxu0 %v426
    %703 = vmatpush.msra.mxu0 %v422
    %704 = vmatpush.msra.mxu0 %v418
    %705 = vmatpush.msra.mxu0 %v414
    %706 = vmatpush.msra.mxu0 %v410
    %707 = vmatpush.msra.mxu0 %v406
    %708 = vmatpush.msra.mxu0 %v402
    %709 = vmatpush.msra.mxu0 %v398
    %710 = vmatpush.msra.mxu0 %v394
    %711 = vmatpush.msra.mxu0 %v390
    %712 = vmatpush.msra.mxu0 %v386
    %713 = vmatpush.msra.mxu0 %v382
    %714 = vmatpush.msra.mxu0 %v378
    %715 = vmatpush.msra.mxu0 %v374
    %716 = vmatpush.msra.mxu0 %v370
    %717 = vmatpush.msra.mxu0 %v366
    %718 = vmatmul.f32.gmra.mxu0 %v234
    %v719 = vpop.f32.mrf.mxu0
    %v720 = vadd.f32 %v700, %v719
    %721 = vdwg.mxu0
    %722 = vmatpush.msra.mxu0 %v490
    %723 = vmatpush.msra.mxu0 %v486
    %724 = vmatpush.msra.mxu0 %v482
    %725 = vmatpush.msra.mxu0 %v478
    %726 = vmatpush.msra.mxu0 %v474
    %727 = vmatpush.msra.mxu0 %v470
    %728 = vmatpush.msra.mxu0 %v466
    %729 = vmatpush.msra.mxu0 %v462
    %730 = vmatpush.msra.mxu0 %v458
    %731 = vmatpush.msra.mxu0 %v454
    %732 = vmatpush.msra.mxu0 %v450
    %733 = vmatpush.msra.mxu0 %v446
    %734 = vmatpush.msra.mxu0 %v442
    %735 = vmatpush.msra.mxu0 %v438
    %736 = vmatpush.msra.mxu0 %v434
    %737 = vmatpush.msra.mxu0 %v430
    %738 = vmatmul.f32.gmra.mxu0 %v235
    %v739 = vpop.f32.mrf.mxu0
    %v740 = vadd.f32 %v720, %v739
    %741 = vdwg.mxu0
    %742 = vmatpush.msra.mxu0 %v299
    %743 = vmatpush.msra.mxu0 %v295
    %744 = vmatpush.msra.mxu0 %v291
    %745 = vmatpush.msra.mxu0 %v287
    %746 = vmatpush.msra.mxu0 %v283
    %747 = vmatpush.msra.mxu0 %v279
    %748 = vmatpush.msra.mxu0 %v275
    %749 = vmatpush.msra.mxu0 %v271
    %750 = vmatpush.msra.mxu0 %v267
    %751 = vmatpush.msra.mxu0 %v263
    %752 = vmatpush.msra.mxu0 %v259
    %753 = vmatpush.msra.mxu0 %v255
    %754 = vmatpush.msra.mxu0 %v251
    %755 = vmatpush.msra.mxu0 %v247
    %756 = vmatpush.msra.mxu0 %v243
    %757 = vmatpush.msra.mxu0 %v239
    %758 = vmatmul.f32.gmra.mxu0 %v232
    %v759 = vpop.f32.mrf.mxu0
    %v760 = vadd.f32 %v497, %v759
    %761 = vdwg.mxu0
    %762 = vmatpush.msra.mxu0 %v363
    %763 = vmatpush.msra.mxu0 %v359
    %764 = vmatpush.msra.mxu0 %v355
    %765 = vmatpush.msra.mxu0 %v351
    %766 = vmatpush.msra.mxu0 %v347
    %767 = vmatpush.msra.mxu0 %v343
    %768 = vmatpush.msra.mxu0 %v339
    %769 = vmatpush.msra.mxu0 %v335
    %770 = vmatpush.msra.mxu0 %v331
    %771 = vmatpush.msra.mxu0 %v327
    %772 = vmatpush.msra.mxu0 %v323
    %773 = vmatpush.msra.mxu0 %v319
    %774 = vmatpush.msra.mxu0 %v315
    %775 = vmatpush.msra.mxu0 %v311
    %776 = vmatpush.msra.mxu0 %v307
    %777 = vmatpush.msra.mxu0 %v303
    %778 = vmatmul.f32.gmra.mxu0 %v233
    %v779 = vpop.f32.mrf.mxu0
    %v780 = vadd.f32 %v760, %v779
    %781 = vdwg.mxu0
    %782 = vmatpush.msra.mxu0 %v427
    %783 = vmatpush.msra.mxu0 %v423
    %784 = vmatpush.msra.mxu0 %v419
    %785 = vmatpush.msra.mxu0 %v415
    %786 = vmatpush.msra.mxu0 %v411
    %787 = vmatpush.msra.mxu0 %v407
    %788 = vmatpush.msra.mxu0 %v403
    %789 = vmatpush.msra.mxu0 %v399
    %790 = vmatpush.msra.mxu0 %v395
    %791 = vmatpush.msra.mxu0 %v391
    %792 = vmatpush.msra.mxu0 %v387
    %793 = vmatpush.msra.mxu0 %v383
    %794 = vmatpush.msra.mxu0 %v379
    %795 = vmatpush.msra.mxu0 %v375
    %796 = vmatpush.msra.mxu0 %v371
    %797 = vmatpush.msra.mxu0 %v367
    %798 = vmatmul.f32.gmra.mxu0 %v234
    %v799 = vpop.f32.mrf.mxu0
    %v800 = vadd.f32 %v780, %v799
    %801 = vdwg.mxu0
    %802 = vmatpush.msra.mxu0 %v491
    %803 = vmatpush.msra.mxu0 %v487
    %804 = vmatpush.msra.mxu0 %v483
    %805 = vmatpush.msra.mxu0 %v479
    %806 = vmatpush.msra.mxu0 %v475
    %807 = vmatpush.msra.mxu0 %v471
    %808 = vmatpush.msra.mxu0 %v467
    %809 = vmatpush.msra.mxu0 %v463
    %810 = vmatpush.msra.mxu0 %v459
    %811 = vmatpush.msra.mxu0 %v455
    %812 = vmatpush.msra.mxu0 %v451
    %813 = vmatpush.msra.mxu0 %v447
    %814 = vmatpush.msra.mxu0 %v443
    %815 = vmatpush.msra.mxu0 %v439
    %816 = vmatpush.msra.mxu0 %v435
    %817 = vmatpush.msra.mxu0 %v431
    %818 = vmatmul.f32.gmra.mxu0 %v235
    %v819 = vpop.f32.mrf.mxu0
    %v820 = vadd.f32 %v800, %v819
    %821 = vdwg.mxu0
    %v822 = vmax.f32 %v580, 0.0
    %v823 = vmax.f32 %v660, 0.0
    %v824 = vmax.f32 %v740, 0.0
    %v825 = vmax.f32 %v820, 0.0
    %v826 = vld [vmem:[%s5] sm:$0xff]
    %v827 = vld [vmem:[%s5 + $0x8] sm:$0xff]
    %v828 = vld [vmem:[%s5 + $0x10] sm:$0xff]
    %v829 = vld [vmem:[%s5 + $0x18] sm:$0xff]
    %v830 = vld [vmem:[%s5 + $0x20] sm:$0xff]
    %v831 = vld [vmem:[%s5 + $0x28] sm:$0xff]
    %v832 = vld [vmem:[%s5 + $0x30] sm:$0xff]
    %v833 = vld [vmem:[%s5 + $0x38] sm:$0xff]
    %v834 = vld [vmem:[%s5 + $0x40] sm:$0xff]
    %v835 = vld [vmem:[%s5 + $0x48] sm:$0xff]
    %v836 = vld [vmem:[%s5 + $0x50] sm:$0xff]
    %v837 = vld [vmem:[%s5 + $0x58] sm:$0xff]
    %v838 = vld [vmem:[%s5 + $0x60] sm:$0xff]
    %v839 = vld [vmem:[%s5 + $0x68] sm:$0xff]
    %v840 = vld [vmem:[%s5 + $0x70] sm:$0xff]
    %v841 = vld [vmem:[%s5 + $0x78] sm:$0xff]
    %v842 = vld [vmem:[%s5 + $0x80] sm:$0xff]
    %v843 = vld [vmem:[%s5 + $0x88] sm:$0xff]
    %v844 = vld [vmem:[%s5 + $0x90] sm:$0xff]
    %v845 = vld [vmem:[%s5 + $0x98] sm:$0xff]
    %v846 = vld [vmem:[%s5 + $0xa0] sm:$0xff]
    %v847 = vld [vmem:[%s5 + $0xa8] sm:$0xff]
    %v848 = vld [vmem:[%s5 + $0xb0] sm:$0xff]
    %v849 = vld [vmem:[%s5 + $0xb8] sm:$0xff]
    %v850 = vld [vmem:[%s5 + $0xc0] sm:$0xff]
    %v851 = vld [vmem:[%s5 + $0xc8] sm:$0xff]
    %v852 = vld [vmem:[%s5 + $0xd0] sm:$0xff]
    %v853 = vld [vmem:[%s5 + $0xd8] sm:$0xff]
    %v854 = vld [vmem:[%s5 + $0xe0] sm:$0xff]
    %v855 = vld [vmem:[%s5 + $0xe8] sm:$0xff]
    %v856 = vld [vmem:[%s5 + $0xf0] sm:$0xff]
    %v857 = vld [vmem:[%s5 + $0xf8] sm:$0xff]
    %v858 = vld [vmem:[%s5 + $0x100] sm:$0xff]
    %v859 = vld [vmem:[%s5 + $0x108] sm:$0xff]
    %v860 = vld [vmem:[%s5 + $0x110] sm:$0xff]
    %v861 = vld [vmem:[%s5 + $0x118] sm:$0xff]
    %v862 = vld [vmem:[%s5 + $0x120] sm:$0xff]
    %v863 = vld [vmem:[%s5 + $0x128] sm:$0xff]
    %v864 = vld [vmem:[%s5 + $0x130] sm:$0xff]
    %v865 = vld [vmem:[%s5 + $0x138] sm:$0xff]
    %v866 = vld [vmem:[%s5 + $0x140] sm:$0xff]
    %v867 = vld [vmem:[%s5 + $0x148] sm:$0xff]
    %v868 = vld [vmem:[%s5 + $0x150] sm:$0xff]
    %v869 = vld [vmem:[%s5 + $0x158] sm:$0xff]
    %v870 = vld [vmem:[%s5 + $0x160] sm:$0xff]
    %v871 = vld [vmem:[%s5 + $0x168] sm:$0xff]
    %v872 = vld [vmem:[%s5 + $0x170] sm:$0xff]
    %v873 = vld [vmem:[%s5 + $0x178] sm:$0xff]
    %v874 = vld [vmem:[%s5 + $0x180] sm:$0xff]
    %v875 = vld [vmem:[%s5 + $0x188] sm:$0xff]
    %v876 = vld [vmem:[%s5 + $0x190] sm:$0xff]
    %v877 = vld [vmem:[%s5 + $0x198] sm:$0xff]
    %v878 = vld [vmem:[%s5 + $0x1a0] sm:$0xff]
    %v879 = vld [vmem:[%s5 + $0x1a8] sm:$0xff]
    %v880 = vld [vmem:[%s5 + $0x1b0] sm:$0xff]
    %v881 = vld [vmem:[%s5 + $0x1b8] sm:$0xff]
    %v882 = vld [vmem:[%s5 + $0x1c0] sm:$0xff]
    %v883 = vld [vmem:[%s5 + $0x1c8] sm:$0xff]
    %v884 = vld [vmem:[%s5 + $0x1d0] sm:$0xff]
    %v885 = vld [vmem:[%s5 + $0x1d8] sm:$0xff]
    %v886 = vld [vmem:[%s5 + $0x1e0] sm:$0xff]
    %v887 = vld [vmem:[%s5 + $0x1e8] sm:$0xff]
    %v888 = vld [vmem:[%s5 + $0x1f0] sm:$0xff]
    %v889 = vld [vmem:[%s5 + $0x1f8] sm:$0xff]
    %v890 = vld [vmem:[%s5 + $0x200] sm:$0xff]
    %v891 = vld [vmem:[%s5 + $0x208] sm:$0xff]
    %v892 = vld [vmem:[%s5 + $0x210] sm:$0xff]
    %v893 = vld [vmem:[%s5 + $0x218] sm:$0xff]
    %v894 = vld [vmem:[%s5 + $0x220] sm:$0xff]
    %v895 = vld [vmem:[%s5 + $0x228] sm:$0xff]
    %v896 = vld [vmem:[%s5 + $0x230] sm:$0xff]
    %v897 = vld [vmem:[%s5 + $0x238] sm:$0xff]
    %v898 = vld [vmem:[%s5 + $0x240] sm:$0xff]
    %v899 = vld [vmem:[%s5 + $0x248] sm:$0xff]
    %v900 = vld [vmem:[%s5 + $0x250] sm:$0xff]
    %v901 = vld [vmem:[%s5 + $0x258] sm:$0xff]
    %v902 = vld [vmem:[%s5 + $0x260] sm:$0xff]
    %v903 = vld [vmem:[%s5 + $0x268] sm:$0xff]
    %v904 = vld [vmem:[%s5 + $0x270] sm:$0xff]
    %v905 = vld [vmem:[%s5 + $0x278] sm:$0xff]
    %v906 = vld [vmem:[%s5 + $0x280] sm:$0xff]
    %v907 = vld [vmem:[%s5 + $0x288] sm:$0xff]
    %v908 = vld [vmem:[%s5 + $0x290] sm:$0xff]
    %v909 = vld [vmem:[%s5 + $0x298] sm:$0xff]
    %v910 = vld [vmem:[%s5 + $0x2a0] sm:$0xff]
    %v911 = vld [vmem:[%s5 + $0x2a8] sm:$0xff]
    %v912 = vld [vmem:[%s5 + $0x2b0] sm:$0xff]
    %v913 = vld [vmem:[%s5 + $0x2b8] sm:$0xff]
    %v914 = vld [vmem:[%s5 + $0x2c0] sm:$0xff]
    %v915 = vld [vmem:[%s5 + $0x2c8] sm:$0xff]
    %v916 = vld [vmem:[%s5 + $0x2d0] sm:$0xff]
    %v917 = vld [vmem:[%s5 + $0x2d8] sm:$0xff]
    %v918 = vld [vmem:[%s5 + $0x2e0] sm:$0xff]
    %v919 = vld [vmem:[%s5 + $0x2e8] sm:$0xff]
    %v920 = vld [vmem:[%s5 + $0x2f0] sm:$0xff]
    %v921 = vld [vmem:[%s5 + $0x2f8] sm:$0xff]
    %v922 = vld [vmem:[%s5 + $0x300] sm:$0xff]
    %v923 = vld [vmem:[%s5 + $0x308] sm:$0xff]
    %v924 = vld [vmem:[%s5 + $0x310] sm:$0xff]
    %v925 = vld [vmem:[%s5 + $0x318] sm:$0xff]
    %v926 = vld [vmem:[%s5 + $0x320] sm:$0xff]
    %v927 = vld [vmem:[%s5 + $0x328] sm:$0xff]
    %v928 = vld [vmem:[%s5 + $0x330] sm:$0xff]
    %v929 = vld [vmem:[%s5 + $0x338] sm:$0xff]
    %v930 = vld [vmem:[%s5 + $0x340] sm:$0xff]
    %v931 = vld [vmem:[%s5 + $0x348] sm:$0xff]
    %v932 = vld [vmem:[%s5 + $0x350] sm:$0xff]
    %v933 = vld [vmem:[%s5 + $0x358] sm:$0xff]
    %v934 = vld [vmem:[%s5 + $0x360] sm:$0xff]
    %v935 = vld [vmem:[%s5 + $0x368] sm:$0xff]
    %v936 = vld [vmem:[%s5 + $0x370] sm:$0xff]
    %v937 = vld [vmem:[%s5 + $0x378] sm:$0xff]
    %v938 = vld [vmem:[%s5 + $0x380] sm:$0xff]
    %v939 = vld [vmem:[%s5 + $0x388] sm:$0xff]
    %v940 = vld [vmem:[%s5 + $0x390] sm:$0xff]
    %v941 = vld [vmem:[%s5 + $0x398] sm:$0xff]
    %v942 = vld [vmem:[%s5 + $0x3a0] sm:$0xff]
    %v943 = vld [vmem:[%s5 + $0x3a8] sm:$0xff]
    %v944 = vld [vmem:[%s5 + $0x3b0] sm:$0xff]
    %v945 = vld [vmem:[%s5 + $0x3b8] sm:$0xff]
    %v946 = vld [vmem:[%s5 + $0x3c0] sm:$0xff]
    %v947 = vld [vmem:[%s5 + $0x3c8] sm:$0xff]
    %v948 = vld [vmem:[%s5 + $0x3d0] sm:$0xff]
    %v949 = vld [vmem:[%s5 + $0x3d8] sm:$0xff]
    %v950 = vld [vmem:[%s5 + $0x3e0] sm:$0xff]
    %v951 = vld [vmem:[%s5 + $0x3e8] sm:$0xff]
    %v952 = vld [vmem:[%s5 + $0x3f0] sm:$0xff]
    %v953 = vld [vmem:[%s5 + $0x3f8] sm:$0xff]
    %v954 = vld [vmem:[%s6] sm:$0x3]
    %v956 = vperm.slane %v954, 0
    %v957 = vperm.slane %v954, 1
    %960 = vmatpush.msra.mxu0 %v856
    %961 = vmatpush.msra.mxu0 %v854
    %962 = vmatpush.msra.mxu0 %v852
    %963 = vmatpush.msra.mxu0 %v850
    %964 = vmatpush.msra.mxu0 %v848
    %965 = vmatpush.msra.mxu0 %v846
    %966 = vmatpush.msra.mxu0 %v844
    %967 = vmatpush.msra.mxu0 %v842
    %968 = vmatpush.msra.mxu0 %v840
    %969 = vmatpush.msra.mxu0 %v838
    %970 = vmatpush.msra.mxu0 %v836
    %971 = vmatpush.msra.mxu0 %v834
    %972 = vmatpush.msra.mxu0 %v832
    %973 = vmatpush.msra.mxu0 %v830
    %974 = vmatpush.msra.mxu0 %v828
    %975 = vmatpush.msra.mxu0 %v826
    %976 = vmatmul.f32.gmra.mxu0 %v822
    %v977 = vpop.f32.mrf.mxu0
    %v978 = vadd.f32 %v956, %v977
    %979 = vdwg.mxu0
    %980 = vmatpush.msra.mxu0 %v888
    %981 = vmatpush.msra.mxu0 %v886
    %982 = vmatpush.msra.mxu0 %v884
    %983 = vmatpush.msra.mxu0 %v882
    %984 = vmatpush.msra.mxu0 %v880
    %985 = vmatpush.msra.mxu0 %v878
    %986 = vmatpush.msra.mxu0 %v876
    %987 = vmatpush.msra.mxu0 %v874
    %988 = vmatpush.msra.mxu0 %v872
    %989 = vmatpush.msra.mxu0 %v870
    %990 = vmatpush.msra.mxu0 %v868
    %991 = vmatpush.msra.mxu0 %v866
    %992 = vmatpush.msra.mxu0 %v864
    %993 = vmatpush.msra.mxu0 %v862
    %994 = vmatpush.msra.mxu0 %v860
    %995 = vmatpush.msra.mxu0 %v858
    %996 = vmatmul.f32.gmra.mxu0 %v823
    %v997 = vpop.f32.mrf.mxu0
    %v998 = vadd.f32 %v978, %v997
    %999 = vdwg.mxu0
    %1000 = vmatpush.msra.mxu0 %v920
    %1001 = vmatpush.msra.mxu0 %v918
    %1002 = vmatpush.msra.mxu0 %v916
    %1003 = vmatpush.msra.mxu0 %v914
    %1004 = vmatpush.msra.mxu0 %v912
    %1005 = vmatpush.msra.mxu0 %v910
    %1006 = vmatpush.msra.mxu0 %v908
    %1007 = vmatpush.msra.mxu0 %v906
    %1008 = vmatpush.msra.mxu0 %v904
    %1009 = vmatpush.msra.mxu0 %v902
    %1010 = vmatpush.msra.mxu0 %v900
    %1011 = vmatpush.msra.mxu0 %v898
    %1012 = vmatpush.msra.mxu0 %v896
    %1013 = vmatpush.msra.mxu0 %v894
    %1014 = vmatpush.msra.mxu0 %v892
    %1015 = vmatpush.msra.mxu0 %v890
    %1016 = vmatmul.f32.gmra.mxu0 %v824
    %v1017 = vpop.f32.mrf.mxu0
    %v1018 = vadd.f32 %v998, %v1017
    %1019 = vdwg.mxu0
    %1020 = vmatpush.msra.mxu0 %v952
    %1021 = vmatpush.msra.mxu0 %v950
    %1022 = vmatpush.msra.mxu0 %v948
    %1023 = vmatpush.msra.mxu0 %v946
    %1024 = vmatpush.msra.mxu0 %v944
    %1025 = vmatpush.msra.mxu0 %v942
    %1026 = vmatpush.msra.mxu0 %v940
    %1027 = vmatpush.msra.mxu0 %v938
    %1028 = vmatpush.msra.mxu0 %v936
    %1029 = vmatpush.msra.mxu0 %v934
    %1030 = vmatpush.msra.mxu0 %v932
    %1031 = vmatpush.msra.mxu0 %v930
    %1032 = vmatpush.msra.mxu0 %v928
    %1033 = vmatpush.msra.mxu0 %v926
    %1034 = vmatpush.msra.mxu0 %v924
    %1035 = vmatpush.msra.mxu0 %v922
    %1036 = vmatmul.f32.gmra.mxu0 %v825
    %v1037 = vpop.f32.mrf.mxu0
    %v1038 = vadd.f32 %v1018, %v1037
    %1039 = vdwg.mxu0
    %1040 = vmatpush.msra.mxu0 %v857
    %1041 = vmatpush.msra.mxu0 %v855
    %1042 = vmatpush.msra.mxu0 %v853
    %1043 = vmatpush.msra.mxu0 %v851
    %1044 = vmatpush.msra.mxu0 %v849
    %1045 = vmatpush.msra.mxu0 %v847
    %1046 = vmatpush.msra.mxu0 %v845
    %1047 = vmatpush.msra.mxu0 %v843
    %1048 = vmatpush.msra.mxu0 %v841
    %1049 = vmatpush.msra.mxu0 %v839
    %1050 = vmatpush.msra.mxu0 %v837
    %1051 = vmatpush.msra.mxu0 %v835
    %1052 = vmatpush.msra.mxu0 %v833
    %1053 = vmatpush.msra.mxu0 %v831
    %1054 = vmatpush.msra.mxu0 %v829
    %1055 = vmatpush.msra.mxu0 %v827
    %1056 = vmatmul.f32.gmra.mxu0 %v822
    %v1057 = vpop.f32.mrf.mxu0
    %v1058 = vadd.f32 %v957, %v1057
    %1059 = vdwg.mxu0
    %1060 = vmatpush.msra.mxu0 %v889
    %1061 = vmatpush.msra.mxu0 %v887
    %1062 = vmatpush.msra.mxu0 %v885
    %1063 = vmatpush.msra.mxu0 %v883
    %1064 = vmatpush.msra.mxu0 %v881
    %1065 = vmatpush.msra.mxu0 %v879
    %1066 = vmatpush.msra.mxu0 %v877
    %1067 = vmatpush.msra.mxu0 %v875
    %1068 = vmatpush.msra.mxu0 %v873
    %1069 = vmatpush.msra.mxu0 %v871
    %1070 = vmatpush.msra.mxu0 %v869
    %1071 = vmatpush.msra.mxu0 %v867
    %1072 = vmatpush.msra.mxu0 %v865
    %1073 = vmatpush.msra.mxu0 %v863
    %1074 = vmatpush.msra.mxu0 %v861
    %1075 = vmatpush.msra.mxu0 %v859
    %1076 = vmatmul.f32.gmra.mxu0 %v823
    %v1077 = vpop.f32.mrf.mxu0
    %v1078 = vadd.f32 %v1058, %v1077
    %1079 = vdwg.mxu0
    %1080 = vmatpush.msra.mxu0 %v921
    %1081 = vmatpush.msra.mxu0 %v919
    %1082 = vmatpush.msra.mxu0 %v917
    %1083 = vmatpush.msra.mxu0 %v915
    %1084 = vmatpush.msra.mxu0 %v913
    %1085 = vmatpush.msra.mxu0 %v911
    %1086 = vmatpush.msra.mxu0 %v909
    %1087 = vmatpush.msra.mxu0 %v907
    %1088 = vmatpush.msra.mxu0 %v905
    %1089 = vmatpush.msra.mxu0 %v903
    %1090 = vmatpush.msra.mxu0 %v901
    %1091 = vmatpush.msra.mxu0 %v899
    %1092 = vmatpush.msra.mxu0 %v897
    %1093 = vmatpush.msra.mxu0 %v895
    %1094 = vmatpush.msra.mxu0 %v893
    %1095 = vmatpush.msra.mxu0 %v891
    %1096 = vmatmul.f32.gmra.mxu0 %v824
    %v1097 = vpop.f32.mrf.mxu0
    %v1098 = vadd.f32 %v1078, %v1097
    %1099 = vdwg.mxu0
    %1100 = vmatpush.msra.mxu0 %v953
    %1101 = vmatpush.msra.mxu0 %v951
    %1102 = vmatpush.msra.mxu0 %v949
    %1103 = vmatpush.msra.mxu0 %v947
    %1104 = vmatpush.msra.mxu0 %v945
    %1105 = vmatpush.msra.mxu0 %v943
    %1106 = vmatpush.msra.mxu0 %v941
    %1107 = vmatpush.msra.mxu0 %v939
    %1108 = vmatpush.msra.mxu0 %v937
    %1109 = vmatpush.msra.mxu0 %v935
    %1110 = vmatpush.msra.mxu0 %v933
    %1111 = vmatpush.msra.mxu0 %v931
    %1112 = vmatpush.msra.mxu0 %v929
    %1113 = vmatpush.msra.mxu0 %v927
    %1114 = vmatpush.msra.mxu0 %v925
    %1115 = vmatpush.msra.mxu0 %v923
    %1116 = vmatmul.f32.gmra.mxu0 %v825
    %v1117 = vpop.f32.mrf.mxu0
    %v1118 = vadd.f32 %v1098, %v1117
    %1119 = vdwg.mxu0
    %v1120 = vmax.f32 %v1038, 0.0
    %v1121 = vmax.f32 %v1118, 0.0
    %v1122 = vld [vmem:[#allocation5] sm:$0xff]
    %v1123 = vld [vmem:[#allocation5 + $0x8] sm:$0xff]
    %v1124 = vld [vmem:[#allocation5 + $0x10] sm:$0xff]
    %v1125 = vld [vmem:[#allocation5 + $0x18] sm:$0xff]
    %v1126 = vld [vmem:[#allocation5 + $0x20] sm:$0xff]
    %v1127 = vld [vmem:[#allocation5 + $0x28] sm:$0xff]
    %v1128 = vld [vmem:[#allocation5 + $0x30] sm:$0xff]
    %v1129 = vld [vmem:[#allocation5 + $0x38] sm:$0xff]
    %v1130 = vld [vmem:[#allocation5 + $0x40] sm:$0xff]
    %v1131 = vld [vmem:[#allocation5 + $0x48] sm:$0xff]
    %v1132 = vld [vmem:[#allocation5 + $0x50] sm:$0xff]
    %v1133 = vld [vmem:[#allocation5 + $0x58] sm:$0xff]
    %v1134 = vld [vmem:[#allocation5 + $0x60] sm:$0xff]
    %v1135 = vld [vmem:[#allocation5 + $0x68] sm:$0xff]
    %v1136 = vld [vmem:[#allocation5 + $0x70] sm:$0xff]
    %v1137 = vld [vmem:[#allocation5 + $0x78] sm:$0xff]
    %v1138 = vld [vmem:[#allocation5 + $0x80] sm:$0xff]
    %v1139 = vld [vmem:[#allocation5 + $0x88] sm:$0xff]
    %v1140 = vld [vmem:[#allocation5 + $0x90] sm:$0xff]
    %v1141 = vld [vmem:[#allocation5 + $0x98] sm:$0xff]
    %v1142 = vld [vmem:[#allocation5 + $0xa0] sm:$0xff]
    %v1143 = vld [vmem:[#allocation5 + $0xa8] sm:$0xff]
    %v1144 = vld [vmem:[#allocation5 + $0xb0] sm:$0xff]
    %v1145 = vld [vmem:[#allocation5 + $0xb8] sm:$0xff]
    %v1146 = vld [vmem:[#allocation5 + $0xc0] sm:$0xff]
    %v1147 = vld [vmem:[#allocation5 + $0xc8] sm:$0xff]
    %v1148 = vld [vmem:[#allocation5 + $0xd0] sm:$0xff]
    %v1149 = vld [vmem:[#allocation5 + $0xd8] sm:$0xff]
    %v1150 = vld [vmem:[#allocation5 + $0xe0] sm:$0xff]
    %v1151 = vld [vmem:[#allocation5 + $0xe8] sm:$0xff]
    %v1152 = vld [vmem:[#allocation5 + $0xf0] sm:$0xff]
    %v1153 = vld [vmem:[#allocation5 + $0xf8] sm:$0xff]
    %v1154 = vld [vmem:[#allocation5 + $0x100] sm:$0xff]
    %v1155 = vld [vmem:[#allocation5 + $0x108] sm:$0xff]
    %v1156 = vld [vmem:[#allocation5 + $0x110] sm:$0xff]
    %v1157 = vld [vmem:[#allocation5 + $0x118] sm:$0xff]
    %v1158 = vld [vmem:[#allocation5 + $0x120] sm:$0xff]
    %v1159 = vld [vmem:[#allocation5 + $0x128] sm:$0xff]
    %v1160 = vld [vmem:[#allocation5 + $0x130] sm:$0xff]
    %v1161 = vld [vmem:[#allocation5 + $0x138] sm:$0xff]
    %v1162 = vld [vmem:[#allocation5 + $0x140] sm:$0xff]
    %v1163 = vld [vmem:[#allocation5 + $0x148] sm:$0xff]
    %v1164 = vld [vmem:[#allocation5 + $0x150] sm:$0xff]
    %v1165 = vld [vmem:[#allocation5 + $0x158] sm:$0xff]
    %v1166 = vld [vmem:[#allocation5 + $0x160] sm:$0xff]
    %v1167 = vld [vmem:[#allocation5 + $0x168] sm:$0xff]
    %v1168 = vld [vmem:[#allocation5 + $0x170] sm:$0xff]
    %v1169 = vld [vmem:[#allocation5 + $0x178] sm:$0xff]
    %v1170 = vld [vmem:[#allocation5 + $0x180] sm:$0xff]
    %v1171 = vld [vmem:[#allocation5 + $0x188] sm:$0xff]
    %v1172 = vld [vmem:[#allocation5 + $0x190] sm:$0xff]
    %v1173 = vld [vmem:[#allocation5 + $0x198] sm:$0xff]
    %v1174 = vld [vmem:[#allocation5 + $0x1a0] sm:$0xff]
    %v1175 = vld [vmem:[#allocation5 + $0x1a8] sm:$0xff]
    %v1176 = vld [vmem:[#allocation5 + $0x1b0] sm:$0xff]
    %v1177 = vld [vmem:[#allocation5 + $0x1b8] sm:$0xff]
    %v1178 = vld [vmem:[#allocation5 + $0x1c0] sm:$0xff]
    %v1179 = vld [vmem:[#allocation5 + $0x1c8] sm:$0xff]
    %v1180 = vld [vmem:[#allocation5 + $0x1d0] sm:$0xff]
    %v1181 = vld [vmem:[#allocation5 + $0x1d8] sm:$0xff]
    %v1182 = vld [vmem:[#allocation5 + $0x1e0] sm:$0xff]
    %v1183 = vld [vmem:[#allocation5 + $0x1e8] sm:$0xff]
    %v1184 = vld [vmem:[#allocation5 + $0x1f0] sm:$0xff]
    %v1185 = vld [vmem:[#allocation5 + $0x1f8] sm:$0xff]
    %v1186 = vld [vmem:[%s8] sm:$0x3]
    %v1188 = vperm.slane %v1186, 0
    %v1189 = vperm.slane %v1186, 1
    %1192 = vmatpush.msra.mxu0 %v1152
    %1193 = vmatpush.msra.mxu0 %v1150
    %1194 = vmatpush.msra.mxu0 %v1148
    %1195 = vmatpush.msra.mxu0 %v1146
    %1196 = vmatpush.msra.mxu0 %v1144
    %1197 = vmatpush.msra.mxu0 %v1142
    %1198 = vmatpush.msra.mxu0 %v1140
    %1199 = vmatpush.msra.mxu0 %v1138
    %1200 = vmatpush.msra.mxu0 %v1136
    %1201 = vmatpush.msra.mxu0 %v1134
    %1202 = vmatpush.msra.mxu0 %v1132
    %1203 = vmatpush.msra.mxu0 %v1130
    %1204 = vmatpush.msra.mxu0 %v1128
    %1205 = vmatpush.msra.mxu0 %v1126
    %1206 = vmatpush.msra.mxu0 %v1124
    %1207 = vmatpush.msra.mxu0 %v1122
    %1208 = vmatmul.f32.gmra.mxu0 %v1120
    %v1209 = vpop.f32.mrf.mxu0
    %v1210 = vadd.f32 %v1188, %v1209
    %1211 = vdwg.mxu0
    %1212 = vmatpush.msra.mxu0 %v1184
    %1213 = vmatpush.msra.mxu0 %v1182
    %1214 = vmatpush.msra.mxu0 %v1180
    %1215 = vmatpush.msra.mxu0 %v1178
    %1216 = vmatpush.msra.mxu0 %v1176
    %1217 = vmatpush.msra.mxu0 %v1174
    %1218 = vmatpush.msra.mxu0 %v1172
    %1219 = vmatpush.msra.mxu0 %v1170
    %1220 = vmatpush.msra.mxu0 %v1168
    %1221 = vmatpush.msra.mxu0 %v1166
    %1222 = vmatpush.msra.mxu0 %v1164
    %1223 = vmatpush.msra.mxu0 %v1162
    %1224 = vmatpush.msra.mxu0 %v1160
    %1225 = vmatpush.msra.mxu0 %v1158
    %1226 = vmatpush.msra.mxu0 %v1156
    %1227 = vmatpush.msra.mxu0 %v1154
    %1228 = vmatmul.f32.gmra.mxu0 %v1121
    %v1229 = vpop.f32.mrf.mxu0
    %v1230 = vadd.f32 %v1210, %v1229
    %1231 = vdwg.mxu0
    %1232 = vmatpush.msra.mxu0 %v1153
    %1233 = vmatpush.msra.mxu0 %v1151
    %1234 = vmatpush.msra.mxu0 %v1149
    %1235 = vmatpush.msra.mxu0 %v1147
    %1236 = vmatpush.msra.mxu0 %v1145
    %1237 = vmatpush.msra.mxu0 %v1143
    %1238 = vmatpush.msra.mxu0 %v1141
    %1239 = vmatpush.msra.mxu0 %v1139
    %1240 = vmatpush.msra.mxu0 %v1137
    %1241 = vmatpush.msra.mxu0 %v1135
    %1242 = vmatpush.msra.mxu0 %v1133
    %1243 = vmatpush.msra.mxu0 %v1131
    %1244 = vmatpush.msra.mxu0 %v1129
    %1245 = vmatpush.msra.mxu0 %v1127
    %1246 = vmatpush.msra.mxu0 %v1125
    %1247 = vmatpush.msra.mxu0 %v1123
    %1248 = vmatmul.f32.gmra.mxu0 %v1120
    %v1249 = vpop.f32.mrf.mxu0
    %v1250 = vadd.f32 %v1189, %v1249
    %1251 = vdwg.mxu0
    %1252 = vmatpush.msra.mxu0 %v1185
    %1253 = vmatpush.msra.mxu0 %v1183
    %1254 = vmatpush.msra.mxu0 %v1181
    %1255 = vmatpush.msra.mxu0 %v1179
    %1256 = vmatpush.msra.mxu0 %v1177
    %1257 = vmatpush.msra.mxu0 %v1175
    %1258 = vmatpush.msra.mxu0 %v1173
    %1259 = vmatpush.msra.mxu0 %v1171
    %1260 = vmatpush.msra.mxu0 %v1169
    %1261 = vmatpush.msra.mxu0 %v1167
    %1262 = vmatpush.msra.mxu0 %v1165
    %1263 = vmatpush.msra.mxu0 %v1163
    %1264 = vmatpush.msra.mxu0 %v1161
    %1265 = vmatpush.msra.mxu0 %v1159
    %1266 = vmatpush.msra.mxu0 %v1157
    %1267 = vmatpush.msra.mxu0 %v1155
    %1268 = vmatmul.f32.gmra.mxu0 %v1121
    %v1269 = vpop.f32.mrf.mxu0
    %v1270 = vadd.f32 %v1250, %v1269
    %1271 = vdwg.mxu0
    %v1272 = vmax.f32 %v1230, 0.0
    %v1273 = vmax.f32 %v1270, 0.0
    %v1274 = vld [vmem:[%s9] sm:$0xff]
    %v1275 = vld [vmem:[%s9 + $0x8] sm:$0xff]
    %v1276 = vld [vmem:[%s9 + $0x10] sm:$0xff]
    %v1277 = vld [vmem:[%s9 + $0x18] sm:$0xff]
    %v1278 = vld [vmem:[%s9 + $0x20] sm:$0xff]
    %v1279 = vld [vmem:[%s9 + $0x28] sm:$0xff]
    %v1280 = vld [vmem:[%s9 + $0x30] sm:$0xff]
    %v1281 = vld [vmem:[%s9 + $0x38] sm:$0xff]
    %v1282 = vld [vmem:[%s9 + $0x40] sm:$0xff]
    %v1283 = vld [vmem:[%s9 + $0x48] sm:$0xff]
    %v1284 = vld [vmem:[%s9 + $0x50] sm:$0xff]
    %v1285 = vld [vmem:[%s9 + $0x58] sm:$0xff]
    %v1286 = vld [vmem:[%s9 + $0x60] sm:$0xff]
    %v1287 = vld [vmem:[%s9 + $0x68] sm:$0xff]
    %v1288 = vld [vmem:[%s9 + $0x70] sm:$0xff]
    %v1289 = vld [vmem:[%s9 + $0x78] sm:$0xff]
    %v1290 = vld [vmem:[%s9 + $0x80] sm:$0xff]
    %v1291 = vld [vmem:[%s9 + $0x88] sm:$0xff]
    %v1292 = vld [vmem:[%s9 + $0x90] sm:$0xff]
    %v1293 = vld [vmem:[%s9 + $0x98] sm:$0xff]
    %v1294 = vld [vmem:[%s9 + $0xa0] sm:$0xff]
    %v1295 = vld [vmem:[%s9 + $0xa8] sm:$0xff]
    %v1296 = vld [vmem:[%s9 + $0xb0] sm:$0xff]
    %v1297 = vld [vmem:[%s9 + $0xb8] sm:$0xff]
    %v1298 = vld [vmem:[%s9 + $0xc0] sm:$0xff]
    %v1299 = vld [vmem:[%s9 + $0xc8] sm:$0xff]
    %v1300 = vld [vmem:[%s9 + $0xd0] sm:$0xff]
    %v1301 = vld [vmem:[%s9 + $0xd8] sm:$0xff]
    %v1302 = vld [vmem:[%s9 + $0xe0] sm:$0xff]
    %v1303 = vld [vmem:[%s9 + $0xe8] sm:$0xff]
    %v1304 = vld [vmem:[%s9 + $0xf0] sm:$0xff]
    %v1305 = vld [vmem:[%s9 + $0xf8] sm:$0xff]
    %v1306 = vld [vmem:[%s10] sm:$0x1]
    %v1308 = vperm.slane %v1306, 0
    %1310 = vmatpush.msra.mxu0 %v1289
    %1311 = vmatpush.msra.mxu0 %v1288
    %1312 = vmatpush.msra.mxu0 %v1287
    %1313 = vmatpush.msra.mxu0 %v1286
    %1314 = vmatpush.msra.mxu0 %v1285
    %1315 = vmatpush.msra.mxu0 %v1284
    %1316 = vmatpush.msra.mxu0 %v1283
    %1317 = vmatpush.msra.mxu0 %v1282
    %1318 = vmatpush.msra.mxu0 %v1281
    %1319 = vmatpush.msra.mxu0 %v1280
    %1320 = vmatpush.msra.mxu0 %v1279
    %1321 = vmatpush.msra.mxu0 %v1278
    %1322 = vmatpush.msra.mxu0 %v1277
    %1323 = vmatpush.msra.mxu0 %v1276
    %1324 = vmatpush.msra.mxu0 %v1275
    %1325 = vmatpush.msra.mxu0 %v1274
    %1326 = vmatmul.f32.gmra.mxu0 %v1272
    %v1327 = vpop.f32.mrf.mxu0
    %v1328 = vadd.f32 %v1308, %v1327
    %1329 = vdwg.mxu0
    %1330 = vmatpush.msra.mxu0 %v1305
    %1331 = vmatpush.msra.mxu0 %v1304
    %1332 = vmatpush.msra.mxu0 %v1303
    %1333 = vmatpush.msra.mxu0 %v1302
    %1334 = vmatpush.msra.mxu0 %v1301
    %1335 = vmatpush.msra.mxu0 %v1300
    %1336 = vmatpush.msra.mxu0 %v1299
    %1337 = vmatpush.msra.mxu0 %v1298
    %1338 = vmatpush.msra.mxu0 %v1297
    %1339 = vmatpush.msra.mxu0 %v1296
    %1340 = vmatpush.msra.mxu0 %v1295
    %1341 = vmatpush.msra.mxu0 %v1294
    %1342 = vmatpush.msra.mxu0 %v1293
    %1343 = vmatpush.msra.mxu0 %v1292
    %1344 = vmatpush.msra.mxu0 %v1291
    %1345 = vmatpush.msra.mxu0 %v1290
    %1346 = vmatmul.f32.gmra.mxu0 %v1273
    %v1347 = vpop.f32.mrf.mxu0
    %v1348 = vadd.f32 %v1328, %v1347
    %1349 = vdwg.mxu0
    %v1350 = vmax.f32 %v1348, 0.0
    %v1351 = vld [vmem:[%s11] sm:$0xff]
    %v1352 = vld [vmem:[%s11 + $0x8] sm:$0xff]
    %v1353 = vld [vmem:[%s11 + $0x10] sm:$0xff]
    %v1354 = vld [vmem:[%s11 + $0x18] sm:$0xff]
    %v1355 = vld [vmem:[%s11 + $0x20] sm:$0xff]
    %v1356 = vld [vmem:[%s11 + $0x28] sm:$0xff]
    %v1357 = vld [vmem:[%s11 + $0x30] sm:$0xff]
    %v1358 = vld [vmem:[%s11 + $0x38] sm:$0xff]
    %v1359 = vld [vmem:[%s11 + $0x40] sm:$0xff]
    %v1360 = vld [vmem:[%s11 + $0x48] sm:$0xff]
    %v1361 = vld [vmem:[%s11 + $0x50] sm:$0xff]
    %v1362 = vld [vmem:[%s11 + $0x58] sm:$0xff]
    %v1363 = vld [vmem:[%s11 + $0x60] sm:$0xff]
    %v1364 = vld [vmem:[%s11 + $0x68] sm:$0xff]
    %v1365 = vld [vmem:[%s11 + $0x70] sm:$0xff]
    %v1366 = vld [vmem:[%s11 + $0x78] sm:$0xff]
    %v1367 = vld [vmem:[%s12] sm:$0x1]
    %v1369 = vperm.slane %v1367, 0
    %1371 = vmatpush.msra.mxu0 %v1366
    %1372 = vmatpush.msra.mxu0 %v1365
    %1373 = vmatpush.msra.mxu0 %v1364
    %1374 = vmatpush.msra.mxu0 %v1363
    %1375 = vmatpush.msra.mxu0 %v1362
    %1376 = vmatpush.msra.mxu0 %v1361
    %1377 = vmatpush.msra.mxu0 %v1360
    %1378 = vmatpush.msra.mxu0 %v1359
    %1379 = vmatpush.msra.mxu0 %v1358
    %1380 = vmatpush.msra.mxu0 %v1357
    %1381 = vmatpush.msra.mxu0 %v1356
    %1382 = vmatpush.msra.mxu0 %v1355
    %1383 = vmatpush.msra.mxu0 %v1354
    %1384 = vmatpush.msra.mxu0 %v1353
    %1385 = vmatpush.msra.mxu0 %v1352
    %1386 = vmatpush.msra.mxu0 %v1351
    %1387 = vmatmul.f32.gmra.mxu0 %v1350
    %v1388 = vpop.f32.mrf.mxu0
    %v1389 = vadd.f32 %v1369, %v1388
    %1390 = vdwg.mxu0
    %1391 = vst [vmem:[#allocation7] sm:$0xff] %v1389
    // Predicated region
    $region62: #{generator_forward.1} parent=1 // pred_check
      _
    $region63: #{generator_forward.1} parent=1 // pred_check_branch
      %1393 = sbr.rel (0) target = $region65
    $region64: #{generator_forward.1} parent=1 // pred_region
      %1395 = vsyncadd [#allocation4], 0
      %s1397 = sshll.u32 [#allocation7], 4
      %s1398 = int_to_ptr.vmem [resolvable:$true] %s1397
      %s1399 = sshll.u32 %s13, 4
      %s1400 = int_to_ptr.hbm [resolvable:$true] %s1399
      %1402 = dma.vmem_to_hbm [thread:$0]  %s1398, 128, %s1400, [#allocation4]
    $region65: #{generator_forward.1} parent=1 // pred_fallthru
      _
    // Predicated region
    $region66: #{generator_forward.1} parent=1 // pred_check
      _
    $region67: #{generator_forward.1} parent=1 // pred_check_branch
      %1404 = sbr.rel (0) target = $region69
    $region68: #{generator_forward.1} parent=1 // pred_region
      %1406 = dma.done [#allocation4], 128
    $region69: #{generator_forward.1} parent=1 // pred_fallthru
      _
    %1407 = vsyncpa [#allocation3], 1
    %1408 = vsyncpa [#allocation6], 1
    %1409 = vsyncpa [#allocation4], 1

</llo_original>
